<compile_context>
chip_gen: v7x
topology: tpu7x:2x2x1
jax: 0.10.0
libtpu: 0.0.40
codegen_flags: <defaults>
</compile_context>

<pallas_src>
import jax
import jax.numpy as jnp
from jax.experimental import pallas as pl
from jax.experimental.pallas import tpu as pltpu

IN_F = 16
HID = 256
OUT_F = 2048 * 3   # 6144


def decoder_kernel(x_ref, w1_ref, b1_ref, w2_ref, b2_ref,
                   w3_ref, s3_ref, b3_ref, o_ref):
    # fc1 / fc2 (tiny) -- recomputed for each output-column tile so grid steps
    # stay fully independent.
    x = x_ref[...].astype(jnp.bfloat16)
    h1 = jnp.dot(x, w1_ref[...], preferred_element_type=jnp.float32)
    h1 = jnp.maximum(h1 + b1_ref[...], 0.0)
    h2 = jnp.dot(h1.astype(jnp.bfloat16), w2_ref[...],
                 preferred_element_type=jnp.float32)
    h2 = jnp.maximum(h2 + b2_ref[...], 0.0)

    # fc3, this column tile only. w3 arrives as int8; |q| <= 127 is exactly
    # representable in bf16, and the per-column scale commutes with the
    # row-reduction, so we scale the f32 accumulator instead of the weights.
    w3 = w3_ref[...].astype(jnp.bfloat16)
    y = jnp.dot(h2.astype(jnp.bfloat16), w3, preferred_element_type=jnp.float32)
    o_ref[...] = (y * s3_ref[...] + b3_ref[...]).astype(o_ref.dtype)


def _pick_tn():
    """Column tile width. v7x (2 TensorCores): 4 tiles so each core gets >=2
    pipelined steps. Single-TC v5e/v6e: 2 tiles (fewer per-step overheads)."""
    try:
        kind = jax.devices()[0].device_kind.lower()
    except Exception:
        kind = ""
    return 1536 if "v7" in kind else 3072


def _make_w3_spec(tn, n_tiles):
    idx = lambda j: (0, j)
    # Deeper buffering only pays off when there are several short tiles per
    # core (v7x path). Guarded: fall back to default double-buffering if this
    # Pallas build doesn't expose pipeline_mode / Buffered.
    if n_tiles >= 4 and hasattr(pl, "Buffered"):
        try:
            return pl.BlockSpec((HID, tn), idx, pipeline_mode=pl.Buffered(3))
        except TypeError:
            pass
    return pl.BlockSpec((HID, tn), idx)


def decoder_forward(x, params):
    """x: (B, ...) flattening to (B, 16). Returns (B, 3, 2048) float32."""
    B = x.shape[0]
    x2d = x.reshape(B, -1).astype(jnp.float32)
    assert x2d.shape[1] == IN_F, f"expected {IN_F} features, got {x2d.shape[1]}"

    # Pad batch to a multiple of 8 (f32 sublane height). The weight stream is
    # the fixed cost per call, so extra rows are essentially free.
    B_pad = max(8, ((B + 7) // 8) * 8)
    if B_pad != B:
        x2d = jnp.pad(x2d, ((0, B_pad - B), (0, 0)))

    w1, b1, w2, b2, w3_q, s3, b3 = params
    tn = _pick_tn()
    n_tiles = OUT_F // tn
    const2d = lambda j: (0, 0)

    flops = 2 * B_pad * (n_tiles * (IN_F * HID + HID * HID) + HID * OUT_F)
    bytes_accessed = (
        w1.size * w1.dtype.itemsize
        + w2.size * w2.dtype.itemsize
        + w3_q.size * w3_q.dtype.itemsize        # int8: dominant stream halved
        + s3.size * 4
        + (b1.size + b2.size + b3.size) * 4
        + x2d.size * 4
        + B_pad * OUT_F * 2                       # bf16 output writeback
    )

    out = pl.pallas_call(
        decoder_kernel,
        out_shape=jax.ShapeDtypeStruct((B_pad, OUT_F), jnp.bfloat16),
        grid=(n_tiles,),
        in_specs=[
            pl.BlockSpec((B_pad, IN_F), const2d),       # x        (resident)
            pl.BlockSpec((IN_F, HID), const2d),         # w1 bf16  (resident)
            pl.BlockSpec((1, HID), const2d),            # b1 f32   (resident)
            pl.BlockSpec((HID, HID), const2d),          # w2 bf16  (resident)
            pl.BlockSpec((1, HID), const2d),            # b2 f32   (resident)
            _make_w3_spec(tn, n_tiles),                 # w3 int8  (streamed)
            pl.BlockSpec((1, tn), lambda j: (0, j)),    # s3 f32   (streamed)
            pl.BlockSpec((1, tn), lambda j: (0, j)),    # b3 f32   (streamed)
        ],
        out_specs=pl.BlockSpec((B_pad, tn), lambda j: (0, j)),
        compiler_params=pltpu.CompilerParams(
            dimension_semantics=("parallel",),
            vmem_limit_bytes=16 << 20,
        ),
        cost_estimate=pl.CostEstimate(
            flops=flops, transcendentals=0, bytes_accessed=bytes_accessed),
    )(x2d, w1, b1, w2, b2, w3_q, s3, b3)

    # Module output dtype is f32; upcast + trim padding + reshape outside.
    return out[:B].astype(jnp.float32).reshape(-1, 3, 2048)


def init_params(key):
    """Deterministic parameter init.
    Weights stored transposed ([in, out]). w1/w2: bf16. w3: int8 with
    per-column f32 scales (symmetric quantization). Biases: f32."""
    k1, k2, k3, k4, k5, k6 = jax.random.split(key, 6)
    scale = 0.05
    w1 = (scale * jax.random.normal(k1, (IN_F, HID), jnp.float32)).astype(jnp.bfloat16)
    b1 = scale * jax.random.normal(k2, (1, HID), jnp.float32)
    w2 = (scale * jax.random.normal(k3, (HID, HID), jnp.float32)).astype(jnp.bfloat16)
    b2 = scale * jax.random.normal(k4, (1, HID), jnp.float32)

    w3_f = scale * jax.random.normal(k5, (HID, OUT_F), jnp.float32)
    s3 = jnp.maximum(jnp.max(jnp.abs(w3_f), axis=0, keepdims=True), 1e-8) / 127.0
    w3_q = jnp.clip(jnp.round(w3_f / s3), -127, 127).astype(jnp.int8)

    b3 = scale * jax.random.normal(k6, (1, OUT_F), jnp.float32)
    return (w1, b1, w2, b2, w3_q, s3, b3)


def decoder_ref(x, params):
    """Pure-JAX reference of the torch forward with the same precision policy
    as the kernel (bf16 weights / int8 w3 + per-column scale / f32 accumulate /
    f32 biases / bf16 output)."""
    w1, b1, w2, b2, w3_q, s3, b3 = params
    h = x.reshape(x.shape[0], -1).astype(jnp.float32)
    h = jnp.maximum(
        jnp.dot(h.astype(jnp.bfloat16), w1, preferred_element_type=jnp.float32) + b1, 0.0)
    h = jnp.maximum(
        jnp.dot(h.astype(jnp.bfloat16), w2, preferred_element_type=jnp.float32) + b2, 0.0)
    y = jnp.dot(h.astype(jnp.bfloat16), w3_q.astype(jnp.bfloat16),
                preferred_element_type=jnp.float32) * s3 + b3
    y = y.astype(jnp.bfloat16).astype(jnp.float32)
    return y.reshape(-1, 3, 2048)


if __name__ == "__main__":
    key = jax.random.PRNGKey(0)
    pkey, xkey = jax.random.split(key)
    params = init_params(pkey)

    # Batch of 2 latent vectors, 16 features each (matches fc1 in_features).
    x = jax.random.normal(xkey, (2, 16), jnp.float32)

    out = decoder_forward(x, params)
    out = jax.block_until_ready(out)

    ref = decoder_ref(x, params)
    assert out.shape == (2, 3, 2048), out.shape
    assert jnp.allclose(out, ref, atol=1e-2, rtol=1e-2), "mismatch vs reference"

    print("KERNEL_OK")
</pallas_src>

<mosaic_0001>
module attributes {stable_mosaic.version = 11 : i64} {
  func.func @decoder_kernel(%arg0: i32, %arg1: memref<8x16xf32, #tpu.memory_space<vmem>>, %arg2: memref<16x256xbf16, #tpu.memory_space<vmem>>, %arg3: memref<1x256xf32, #tpu.memory_space<vmem>>, %arg4: memref<256x256xbf16, #tpu.memory_space<vmem>>, %arg5: memref<1x256xf32, #tpu.memory_space<vmem>>, %arg6: memref<256x3072xi8, #tpu.memory_space<vmem>>, %arg7: memref<1x3072xf32, #tpu.memory_space<vmem>>, %arg8: memref<1x3072xf32, #tpu.memory_space<vmem>>, %arg9: memref<8x3072xbf16, #tpu.memory_space<vmem>>) attributes {dimension_semantics = [#tpu.dimension_semantics<parallel>], iteration_bounds = array<i64: 2>, scalar_prefetch = 0 : i64, scratch_operands = 0 : i64, tpu.core_type = #tpu.core_type<tc>, window_params = [{pipeline_mode = #tpu.pipeline_mode<synchronous>, transform_indices = @transform_0, window_bounds = array<i64: 8, 16>}, {pipeline_mode = #tpu.pipeline_mode<synchronous>, transform_indices = @transform_1, window_bounds = array<i64: 16, 256>}, {pipeline_mode = #tpu.pipeline_mode<synchronous>, transform_indices = @transform_2, window_bounds = array<i64: 1, 256>}, {pipeline_mode = #tpu.pipeline_mode<synchronous>, transform_indices = @transform_3, window_bounds = array<i64: 256, 256>}, {pipeline_mode = #tpu.pipeline_mode<synchronous>, transform_indices = @transform_4, window_bounds = array<i64: 1, 256>}, {transform_indices = @transform_5, window_bounds = array<i64: 256, 3072>}, {transform_indices = @transform_6, window_bounds = array<i64: 1, 3072>}, {transform_indices = @transform_7, window_bounds = array<i64: 1, 3072>}, {transform_indices = @transform_8, window_bounds = array<i64: 8, 3072>}]} {
    %c0 = arith.constant 0 : index
    %c0_0 = arith.constant 0 : index
    %0 = vector.load %arg1[%c0, %c0_0] : memref<8x16xf32, #tpu.memory_space<vmem>>, vector<8x16xf32>
    %1 = arith.truncf %0 : vector<8x16xf32> to vector<8x16xbf16>
    %c0_1 = arith.constant 0 : index
    %c0_2 = arith.constant 0 : index
    %2 = vector.load %arg2[%c0_1, %c0_2] : memref<16x256xbf16, #tpu.memory_space<vmem>>, vector<16x256xbf16>
    %cst = arith.constant dense<0.000000e+00> : vector<8x256xf32>
    %3 = tpu.matmul %1, %2, %cst {dimension_numbers = #tpu.dot_dimension_numbers<[1], [0], [0], [1], [0, 0, 1, 1], [], []>} : vector<8x16xbf16>, vector<16x256xbf16>, vector<8x256xf32> -> vector<8x256xf32>
    %c0_3 = arith.constant 0 : index
    %c0_4 = arith.constant 0 : index
    %4 = vector.load %arg3[%c0_3, %c0_4] : memref<1x256xf32, #tpu.memory_space<vmem>>, vector<1x256xf32>
    %5 = vector.broadcast %4 : vector<1x256xf32> to vector<8x256xf32>
    %6 = arith.addf %3, %5 : vector<8x256xf32>
    %cst_5 = arith.constant 0.000000e+00 : f32
    %7 = vector.broadcast %cst_5 : f32 to vector<8x256xf32>
    %8 = arith.maximumf %6, %7 : vector<8x256xf32>
    %9 = arith.truncf %8 : vector<8x256xf32> to vector<8x256xbf16>
    %c0_6 = arith.constant 0 : index
    %c0_7 = arith.constant 0 : index
    %10 = vector.load %arg4[%c0_6, %c0_7] : memref<256x256xbf16, #tpu.memory_space<vmem>>, vector<256x256xbf16>
    %cst_8 = arith.constant dense<0.000000e+00> : vector<8x256xf32>
    %11 = tpu.matmul %9, %10, %cst_8 {dimension_numbers = #tpu.dot_dimension_numbers<[1], [0], [0], [1], [0, 0, 1, 1], [], []>} : vector<8x256xbf16>, vector<256x256xbf16>, vector<8x256xf32> -> vector<8x256xf32>
    %c0_9 = arith.constant 0 : index
    %c0_10 = arith.constant 0 : index
    %12 = vector.load %arg5[%c0_9, %c0_10] : memref<1x256xf32, #tpu.memory_space<vmem>>, vector<1x256xf32>
    %13 = vector.broadcast %12 : vector<1x256xf32> to vector<8x256xf32>
    %14 = arith.addf %11, %13 : vector<8x256xf32>
    %cst_11 = arith.constant 0.000000e+00 : f32
    %15 = vector.broadcast %cst_11 : f32 to vector<8x256xf32>
    %16 = arith.maximumf %14, %15 : vector<8x256xf32>
    %c0_12 = arith.constant 0 : index
    %c0_13 = arith.constant 0 : index
    %17 = vector.load %arg6[%c0_12, %c0_13] : memref<256x3072xi8, #tpu.memory_space<vmem>>, vector<256x3072xi8>
    %18 = arith.sitofp %17 : vector<256x3072xi8> to vector<256x3072xbf16>
    %19 = arith.truncf %16 : vector<8x256xf32> to vector<8x256xbf16>
    %cst_14 = arith.constant dense<0.000000e+00> : vector<8x3072xf32>
    %20 = tpu.matmul %19, %18, %cst_14 {dimension_numbers = #tpu.dot_dimension_numbers<[1], [0], [0], [1], [0, 0, 1, 1], [], []>} : vector<8x256xbf16>, vector<256x3072xbf16>, vector<8x3072xf32> -> vector<8x3072xf32>
    %c0_15 = arith.constant 0 : index
    %c0_16 = arith.constant 0 : index
    %21 = vector.load %arg7[%c0_15, %c0_16] : memref<1x3072xf32, #tpu.memory_space<vmem>>, vector<1x3072xf32>
    %22 = vector.broadcast %21 : vector<1x3072xf32> to vector<8x3072xf32>
    %23 = arith.mulf %20, %22 : vector<8x3072xf32>
    %c0_17 = arith.constant 0 : index
    %c0_18 = arith.constant 0 : index
    %24 = vector.load %arg8[%c0_17, %c0_18] : memref<1x3072xf32, #tpu.memory_space<vmem>>, vector<1x3072xf32>
    %25 = vector.broadcast %24 : vector<1x3072xf32> to vector<8x3072xf32>
    %26 = arith.addf %23, %25 : vector<8x3072xf32>
    %27 = arith.truncf %26 : vector<8x3072xf32> to vector<8x3072xbf16>
    %c0_19 = arith.constant 0 : index
    %c0_20 = arith.constant 0 : index
    %28 = vector.load %arg9[%c0_19, %c0_20] : memref<8x3072xbf16, #tpu.memory_space<vmem>>, vector<8x3072xbf16>
    tpu.vector_store %arg9[%c0_19, %c0_20], %27 {strides = array<i32>} : memref<8x3072xbf16, #tpu.memory_space<vmem>>, vector<8x3072xbf16>,
    return
  }
  func.func @transform_0(%arg0: i32) -> (i32, i32) {
    %c0_i32 = arith.constant 0 : i32
    %c0_i32_0 = arith.constant 0 : i32
    %c0_i32_1 = arith.constant 0 : i32
    return %c0_i32, %c0_i32_0 : i32, i32
  }
  func.func @transform_1(%arg0: i32) -> (i32, i32) {
    %c0_i32 = arith.constant 0 : i32
    %c0_i32_0 = arith.constant 0 : i32
    %c0_i32_1 = arith.constant 0 : i32
    return %c0_i32, %c0_i32_0 : i32, i32
  }
  func.func @transform_2(%arg0: i32) -> (i32, i32) {
    %c0_i32 = arith.constant 0 : i32
    %c0_i32_0 = arith.constant 0 : i32
    %c0_i32_1 = arith.constant 0 : i32
    return %c0_i32, %c0_i32_0 : i32, i32
  }
  func.func @transform_3(%arg0: i32) -> (i32, i32) {
    %c0_i32 = arith.constant 0 : i32
    %c0_i32_0 = arith.constant 0 : i32
    %c0_i32_1 = arith.constant 0 : i32
    return %c0_i32, %c0_i32_0 : i32, i32
  }
  func.func @transform_4(%arg0: i32) -> (i32, i32) {
    %c0_i32 = arith.constant 0 : i32
    %c0_i32_0 = arith.constant 0 : i32
    %c0_i32_1 = arith.constant 0 : i32
    return %c0_i32, %c0_i32_0 : i32, i32
  }
  func.func @transform_5(%arg0: i32) -> (i32, i32) {
    %c0_i32 = arith.constant 0 : i32
    %c0_i32_0 = arith.constant 0 : i32
    return %c0_i32, %arg0 : i32, i32
  }
  func.func @transform_6(%arg0: i32) -> (i32, i32) {
    %c0_i32 = arith.constant 0 : i32
    %c0_i32_0 = arith.constant 0 : i32
    return %c0_i32, %arg0 : i32, i32
  }
  func.func @transform_7(%arg0: i32) -> (i32, i32) {
    %c0_i32 = arith.constant 0 : i32
    %c0_i32_0 = arith.constant 0 : i32
    return %c0_i32, %arg0 : i32, i32
  }
  func.func @transform_8(%arg0: i32) -> (i32, i32) {
    %c0_i32 = arith.constant 0 : i32
    %c0_i32_0 = arith.constant 0 : i32
    return %c0_i32, %arg0 : i32, i32
  }
}

</mosaic_0001>

<llo_original>
// kernel: tpu_custom_call.1
$region0: #{tpu_custom_call.1}
  #allocation0 [shape = 'u32[]', space=smem, size = 0x4, offset = 0x4, fixed_abs, tag = 'smem constant byte address 0x4 - core index']
  #allocation1 [shape = 'u32[144,128]{1,0:T(1,128)}', space=vmem, size = 0x12000, scoped, tag = 'internal scratch']
  %s0 = inlined_call_operand.hbm [shape: f32[8,16], index: 0, kind: input, shape index: {}]
  %s1 = inlined_call_operand.hbm [shape: bf16[16,256], index: 1, kind: input, shape index: {}]
  %s2 = inlined_call_operand.hbm [shape: f32[1,256], index: 2, kind: input, shape index: {}]
  %s3 = inlined_call_operand.hbm [shape: bf16[256,256], index: 3, kind: input, shape index: {}]
  %s4 = inlined_call_operand.hbm [shape: f32[1,256], index: 4, kind: input, shape index: {}]
  %s5 = inlined_call_operand.hbm [shape: s8[256,6144], index: 5, kind: input, shape index: {}]
  %s6 = inlined_call_operand.hbm [shape: f32[1,6144], index: 6, kind: input, shape index: {}]
  %s7 = inlined_call_operand.hbm [shape: f32[1,6144], index: 7, kind: input, shape index: {}]
  %s8 = inlined_call_operand.hbm [shape: bf16[8,6144], index: 8, kind: output, shape index: {}]
  %s9 = sld [smem:[#allocation0]]
  $region97: #{tpu_custom_call.1} parent=0
    _
  %s11 = ssub.s32 1, %s9
  %s12 = scalar_select 0, %s11, %s9
  $region1: #{tpu_custom_call.1} parent=0
    #allocation2 [shape = 'u8[4096]{0}', space=vmem, size = 0x1000, scoped, tag = 'input window, operand 0, single buffered']
    #allocation3 [shape = 's32[2]{0}', space=sflag, size = 0x8, scoped, tag = 'scoped memory for tpu_custom_call.1']
    #allocation4 [shape = 's32[2]{0}', space=sflag, size = 0x8, scoped, tag = 'scoped memory for tpu_custom_call.1']
    #allocation5 [shape = 'u8[8192]{0}', space=vmem, size = 0x2000, scoped, tag = 'input window, operand 1, single buffered']
    #allocation6 [shape = 's32[1]{0}', space=sflag, size = 0x4, scoped, tag = 'scoped memory for tpu_custom_call.1']
    #allocation7 [shape = 'u8[1024]{0}', space=vmem, size = 0x400, scoped, tag = 'input window, operand 2, single buffered']
    #allocation8 [shape = 'u8[131072]{0}', space=vmem, size = 0x20000, scoped, tag = 'input window, operand 3, single buffered']
    #allocation9 [shape = 's32[1]{0}', space=sflag, size = 0x4, scoped, tag = 'scoped memory for tpu_custom_call.1']
    #allocation10 [shape = 'u8[1024]{0}', space=vmem, size = 0x400, scoped, tag = 'input window, operand 4, single buffered']
    #allocation11 [shape = 'u8[1572864]{0}', space=vmem, size = 0x180000, scoped, tag = 'input window, operand 5']
    #allocation12 [shape = 's32[2]{0}', space=sflag, size = 0x8, scoped, tag = 'scoped memory for tpu_custom_call.1']
    #allocation13 [shape = 'u8[24576]{0}', space=vmem, size = 0x6000, scoped, tag = 'input window, operand 6']
    #allocation14 [shape = 'u8[24576]{0}', space=vmem, size = 0x6000, scoped, tag = 'input window, operand 7']
    #allocation15 [shape = 's32[2]{0}', space=sflag, size = 0x8, scoped, tag = 'scoped memory for tpu_custom_call.1']
    #allocation16 [shape = 'u8[98304]{0}', space=vmem, size = 0x18000, scoped, tag = 'output window, operand 0']
    %13 = vsyncpa [#allocation3], 0
    %14 = vsyncpa [#allocation6], 0
    %15 = vsyncpa [#allocation9], 0
    %16 = vsyncpa [#allocation12], 0
    %s17 = scalar_lea.sflag [#allocation12], 1
    %18 = vsyncpa %s17, 0
    %19 = vsyncpa [#allocation15], 0
    %s20 = scalar_lea.sflag [#allocation15], 1
    %21 = vsyncpa %s20, 0
    %22 = vsyncpa [#allocation4], 0
    %s23 = scalar_lea.sflag [#allocation4], 1
    %24 = vsyncpa %s23, 0
    loop: start=0, step=1, limit=4
    $region2: #{tpu_custom_call.1} parent=1 // loop_pre_header
      _
    $region3: #{tpu_custom_call.1} parent=1 // loop_header
      %s26 = sphi 0, %s30
      %p27 = scmp.ge.s32.totalorder %s26, 4
      %s34 = sphi 0, %s34
      %s36 = sphi 0, %s34
      %s37 = sphi 0, %s36
      %s51 = sphi 0, %s37
      %s55 = sphi 0, %s55
      %s57 = sphi 0, %s55
      %s58 = sphi 0, %s57
      %s72 = sphi 0, %s58
      %s76 = sphi 0, %s76
      %s78 = sphi 0, %s76
      %s79 = sphi 0, %s78
      %s93 = sphi 0, %s79
      %s97 = sphi 0, %s97
      %s99 = sphi 0, %s97
      %s100 = sphi 0, %s99
      %s114 = sphi 0, %s100
      %s118 = sphi 0, %s118
      %s120 = sphi 0, %s118
      %s121 = sphi 0, %s120
      %s135 = sphi 0, %s121
      %s141 = sphi 0, %s143
      %s144 = sphi 0, %s141
      %s145 = sphi 0, %s144
      %s161 = sphi 0, %s145
      %s167 = sphi 0, %s169
      %s170 = sphi 0, %s167
      %s171 = sphi 0, %s170
      %s187 = sphi 0, %s171
      %s193 = sphi 0, %s195
      %s196 = sphi 0, %s193
      %s197 = sphi 0, %s196
      %s213 = sphi 0, %s197
      %s219 = sphi 0, %s221
      %s222 = sphi 0, %s219
      %s223 = sphi 0, %s222
      %s239 = sphi 0, %s223
    $region4: #{tpu_custom_call.1} parent=1 // loop_header_branch
      %29 = sbr.rel (%p27) target = $region8
    $region5: #{tpu_custom_call.1} parent=1 // loop_body
      %s31 = ssub.s32 %s26, 1
      %s32 = ssub.s32 %s26, 2
      %s33 = sadd.s32 %s26, 1
      %s35 = sadd.s32 %s34, 1
      %p38 = scmp.eq.s32.totalorder %s26, 1
      %p39 = scmp.ne.s32.totalorder %s34, %s36
      %p40 = scmp.eq.s32.totalorder %s26, 0
      %p41 = por %p39, %p40
      %p42 = scmp.ne.s32.totalorder %s34, %s36
      %p43 = scmp.eq.s32.totalorder %s31, 1
      %p44 = por %p42, %p43
      %p45 = scmp.ne.s32.totalorder %s36, %s37
      %p46 = scmp.eq.s32.totalorder %s31, 0
      %p47 = por %p45, %p46
      %p48 = scmp.ne.s32.totalorder %s36, %s37
      %p49 = scmp.eq.s32.totalorder %s32, 1
      %p50 = por %p48, %p49
      %p52 = scmp.ne.s32.totalorder %s37, %s51
      %p53 = scmp.eq.s32.totalorder %s32, 0
      %p54 = por %p52, %p53
      %s56 = sadd.s32 %s55, 1
      %p59 = scmp.eq.s32.totalorder %s26, 1
      %p60 = scmp.ne.s32.totalorder %s55, %s57
      %p61 = scmp.eq.s32.totalorder %s26, 0
      %p62 = por %p60, %p61
      %p63 = scmp.ne.s32.totalorder %s55, %s57
      %p64 = scmp.eq.s32.totalorder %s31, 1
      %p65 = por %p63, %p64
      %p66 = scmp.ne.s32.totalorder %s57, %s58
      %p67 = scmp.eq.s32.totalorder %s31, 0
      %p68 = por %p66, %p67
      %p69 = scmp.ne.s32.totalorder %s57, %s58
      %p70 = scmp.eq.s32.totalorder %s32, 1
      %p71 = por %p69, %p70
      %p73 = scmp.ne.s32.totalorder %s58, %s72
      %p74 = scmp.eq.s32.totalorder %s32, 0
      %p75 = por %p73, %p74
      %s77 = sadd.s32 %s76, 1
      %p80 = scmp.eq.s32.totalorder %s26, 1
      %p81 = scmp.ne.s32.totalorder %s76, %s78
      %p82 = scmp.eq.s32.totalorder %s26, 0
      %p83 = por %p81, %p82
      %p84 = scmp.ne.s32.totalorder %s76, %s78
      %p85 = scmp.eq.s32.totalorder %s31, 1
      %p86 = por %p84, %p85
      %p87 = scmp.ne.s32.totalorder %s78, %s79
      %p88 = scmp.eq.s32.totalorder %s31, 0
      %p89 = por %p87, %p88
      %p90 = scmp.ne.s32.totalorder %s78, %s79
      %p91 = scmp.eq.s32.totalorder %s32, 1
      %p92 = por %p90, %p91
      %p94 = scmp.ne.s32.totalorder %s79, %s93
      %p95 = scmp.eq.s32.totalorder %s32, 0
      %p96 = por %p94, %p95
      %s98 = sadd.s32 %s97, 1
      %p101 = scmp.eq.s32.totalorder %s26, 1
      %p102 = scmp.ne.s32.totalorder %s97, %s99
      %p103 = scmp.eq.s32.totalorder %s26, 0
      %p104 = por %p102, %p103
      %p105 = scmp.ne.s32.totalorder %s97, %s99
      %p106 = scmp.eq.s32.totalorder %s31, 1
      %p107 = por %p105, %p106
      %p108 = scmp.ne.s32.totalorder %s99, %s100
      %p109 = scmp.eq.s32.totalorder %s31, 0
      %p110 = por %p108, %p109
      %p111 = scmp.ne.s32.totalorder %s99, %s100
      %p112 = scmp.eq.s32.totalorder %s32, 1
      %p113 = por %p111, %p112
      %p115 = scmp.ne.s32.totalorder %s100, %s114
      %p116 = scmp.eq.s32.totalorder %s32, 0
      %p117 = por %p115, %p116
      %s119 = sadd.s32 %s118, 1
      %p122 = scmp.eq.s32.totalorder %s26, 1
      %p123 = scmp.ne.s32.totalorder %s118, %s120
      %p124 = scmp.eq.s32.totalorder %s26, 0
      %p125 = por %p123, %p124
      %p126 = scmp.ne.s32.totalorder %s118, %s120
      %p127 = scmp.eq.s32.totalorder %s31, 1
      %p128 = por %p126, %p127
      %p129 = scmp.ne.s32.totalorder %s120, %s121
      %p130 = scmp.eq.s32.totalorder %s31, 0
      %p131 = por %p129, %p130
      %p132 = scmp.ne.s32.totalorder %s120, %s121
      %p133 = scmp.eq.s32.totalorder %s32, 1
      %p134 = por %p132, %p133
      %p136 = scmp.ne.s32.totalorder %s121, %s135
      %p137 = scmp.eq.s32.totalorder %s32, 0
      %p138 = por %p136, %p137
      %s139 = ssub.s32 %s26, %s33
      %p140 = scmp.eq.s32.totalorder %s139, 0
      %s142 = sadd.s32 %s141, 1
      %s143 = scalar_select %p140, %s141, %s142
      %p146 = pneg %p140
      %p147 = scmp.eq.s32.totalorder %s26, 1
      %p148 = por %p146, %p147
      %p149 = scmp.ne.s32.totalorder %s141, %s144
      %p150 = scmp.eq.s32.totalorder %s26, 0
      %p151 = por %p149, %p150
      %p152 = scmp.ne.s32.totalorder %s141, %s144
      %p153 = scmp.eq.s32.totalorder %s31, 1
      %p154 = por %p152, %p153
      %p155 = scmp.ne.s32.totalorder %s144, %s145
      %p156 = scmp.eq.s32.totalorder %s31, 0
      %p157 = por %p155, %p156
      %p158 = scmp.ne.s32.totalorder %s144, %s145
      %p159 = scmp.eq.s32.totalorder %s32, 1
      %p160 = por %p158, %p159
      %p162 = scmp.ne.s32.totalorder %s145, %s161
      %p163 = scmp.eq.s32.totalorder %s32, 0
      %p164 = por %p162, %p163
      %s165 = ssub.s32 %s26, %s33
      %p166 = scmp.eq.s32.totalorder %s165, 0
      %s168 = sadd.s32 %s167, 1
      %s169 = scalar_select %p166, %s167, %s168
      %p172 = pneg %p166
      %p173 = scmp.eq.s32.totalorder %s26, 1
      %p174 = por %p172, %p173
      %p175 = scmp.ne.s32.totalorder %s167, %s170
      %p176 = scmp.eq.s32.totalorder %s26, 0
      %p177 = por %p175, %p176
      %p178 = scmp.ne.s32.totalorder %s167, %s170
      %p179 = scmp.eq.s32.totalorder %s31, 1
      %p180 = por %p178, %p179
      %p181 = scmp.ne.s32.totalorder %s170, %s171
      %p182 = scmp.eq.s32.totalorder %s31, 0
      %p183 = por %p181, %p182
      %p184 = scmp.ne.s32.totalorder %s170, %s171
      %p185 = scmp.eq.s32.totalorder %s32, 1
      %p186 = por %p184, %p185
      %p188 = scmp.ne.s32.totalorder %s171, %s187
      %p189 = scmp.eq.s32.totalorder %s32, 0
      %p190 = por %p188, %p189
      %s191 = ssub.s32 %s26, %s33
      %p192 = scmp.eq.s32.totalorder %s191, 0
      %s194 = sadd.s32 %s193, 1
      %s195 = scalar_select %p192, %s193, %s194
      %p198 = pneg %p192
      %p199 = scmp.eq.s32.totalorder %s26, 1
      %p200 = por %p198, %p199
      %p201 = scmp.ne.s32.totalorder %s193, %s196
      %p202 = scmp.eq.s32.totalorder %s26, 0
      %p203 = por %p201, %p202
      %p204 = scmp.ne.s32.totalorder %s193, %s196
      %p205 = scmp.eq.s32.totalorder %s31, 1
      %p206 = por %p204, %p205
      %p207 = scmp.ne.s32.totalorder %s196, %s197
      %p208 = scmp.eq.s32.totalorder %s31, 0
      %p209 = por %p207, %p208
      %p210 = scmp.ne.s32.totalorder %s196, %s197
      %p211 = scmp.eq.s32.totalorder %s32, 1
      %p212 = por %p210, %p211
      %p214 = scmp.ne.s32.totalorder %s197, %s213
      %p215 = scmp.eq.s32.totalorder %s32, 0
      %p216 = por %p214, %p215
      %s217 = ssub.s32 %s26, %s33
      %p218 = scmp.eq.s32.totalorder %s217, 0
      %s220 = sadd.s32 %s219, 1
      %s221 = scalar_select %p218, %s219, %s220
      %p224 = pneg %p218
      %p225 = scmp.eq.s32.totalorder %s26, 1
      %p226 = por %p224, %p225
      %p227 = scmp.ne.s32.totalorder %s219, %s222
      %p228 = scmp.eq.s32.totalorder %s26, 0
      %p229 = por %p227, %p228
      %p230 = scmp.ne.s32.totalorder %s219, %s222
      %p231 = scmp.eq.s32.totalorder %s31, 1
      %p232 = por %p230, %p231
      %p233 = scmp.ne.s32.totalorder %s222, %s223
      %p234 = scmp.eq.s32.totalorder %s31, 0
      %p235 = por %p233, %p234
      %p236 = scmp.ne.s32.totalorder %s222, %s223
      %p237 = scmp.eq.s32.totalorder %s32, 1
      %p238 = por %p236, %p237
      %p240 = scmp.ne.s32.totalorder %s223, %s239
      %p241 = scmp.eq.s32.totalorder %s32, 0
      %p242 = por %p240, %p241
      %p243 = scmp.le.s32.totalorder 1, %s26
      %p244 = scmp.lt.s32.totalorder %s26, 3
      %p245 = pnand %p243, %p244
      %p246 = pneg %p245
      // Predicated region
      $region9: #{tpu_custom_call.1} parent=5 // pred_check
        _
      $region10: #{tpu_custom_call.1} parent=5 // pred_check_branch
        %248 = sbr.rel (%p245) target = $region12
      $region11: #{tpu_custom_call.1} parent=5 // pred_region
        %s249 = ssub.s32 %s26, 1
        // Predicated region
        $region13: #{tpu_custom_call.1} parent=11 // pred_check
          %p250 = pneg %p47
        $region14: #{tpu_custom_call.1} parent=11 // pred_check_branch
          %252 = sbr.rel (%p250) target = $region16
        $region15: #{tpu_custom_call.1} parent=11 // pred_region
          %s254 = ssub.s32 128, 128
          %255 = vsyncadd [#allocation3], %s254
          %s257 = sshll.u32 [#allocation2], 4
          %s258 = int_to_ptr.vmem [resolvable:$true] %s257
          %260 = dma.hbm_to_vmem [thread:$0]  %s0, 128, %s258, [#allocation3]
        $region16: #{tpu_custom_call.1} parent=11 // pred_fallthru
          _
        // Predicated region
        $region17: #{tpu_custom_call.1} parent=11 // pred_check
          %p261 = pneg %p68
        $region18: #{tpu_custom_call.1} parent=11 // pred_check_branch
          %263 = sbr.rel (%p261) target = $region20
        $region19: #{tpu_custom_call.1} parent=11 // pred_region
          %s265 = ssub.s32 256, 256
          %266 = vsyncadd [#allocation6], %s265
          %s267 = sshll.u32 [#allocation5], 4
          %s268 = int_to_ptr.vmem [resolvable:$true] %s267
          %273 = dma.hbm_to_vmem [thread:$0]  %s1, 256, %s268, [#allocation6], 128, 128, 8
        $region20: #{tpu_custom_call.1} parent=11 // pred_fallthru
          _
        // Predicated region
        $region21: #{tpu_custom_call.1} parent=11 // pred_check
          %p274 = pneg %p89
        $region22: #{tpu_custom_call.1} parent=11 // pred_check_branch
          %276 = sbr.rel (%p274) target = $region24
        $region23: #{tpu_custom_call.1} parent=11 // pred_region
          %s278 = ssub.s32 32, 32
          %279 = vsyncadd [#allocation6], %s278
          %s281 = sshll.u32 [#allocation7], 4
          %s282 = int_to_ptr.vmem [resolvable:$true] %s281
          %284 = dma.hbm_to_vmem [thread:$0]  %s2, 32, %s282, [#allocation6]
        $region24: #{tpu_custom_call.1} parent=11 // pred_fallthru
          _
        // Predicated region
        $region25: #{tpu_custom_call.1} parent=11 // pred_check
          %p285 = pneg %p110
        $region26: #{tpu_custom_call.1} parent=11 // pred_check_branch
          %287 = sbr.rel (%p285) target = $region28
        $region27: #{tpu_custom_call.1} parent=11 // pred_region
          %s289 = ssub.s32 4096, 4096
          %290 = vsyncadd [#allocation9], %s289
          %s291 = sshll.u32 [#allocation8], 4
          %s292 = int_to_ptr.vmem [resolvable:$true] %s291
          %297 = dma.hbm_to_vmem [thread:$0]  %s3, 4096, %s292, [#allocation9], 128, 128, 8
        $region28: #{tpu_custom_call.1} parent=11 // pred_fallthru
          _
        // Predicated region
        $region29: #{tpu_custom_call.1} parent=11 // pred_check
          %p298 = pneg %p131
        $region30: #{tpu_custom_call.1} parent=11 // pred_check_branch
          %300 = sbr.rel (%p298) target = $region32
        $region31: #{tpu_custom_call.1} parent=11 // pred_region
          %s302 = ssub.s32 32, 32
          %303 = vsyncadd [#allocation9], %s302
          %s305 = sshll.u32 [#allocation10], 4
          %s306 = int_to_ptr.vmem [resolvable:$true] %s305
          %308 = dma.hbm_to_vmem [thread:$0]  %s4, 32, %s306, [#allocation9]
        $region32: #{tpu_custom_call.1} parent=11 // pred_fallthru
          _
      $region12: #{tpu_custom_call.1} parent=5 // pred_fallthru
        _
      %p309 = scmp.lt.s32.totalorder %s26, 2
      // Predicated region
      $region33: #{tpu_custom_call.1} parent=5 // pred_check
        %p310 = pneg %p309
      $region34: #{tpu_custom_call.1} parent=5 // pred_check_branch
        %312 = sbr.rel (%p310) target = $region36
      $region35: #{tpu_custom_call.1} parent=5 // pred_region
        // Predicated region
        $region37: #{tpu_custom_call.1} parent=35 // pred_check
          %p313 = pneg %p151
        $region38: #{tpu_custom_call.1} parent=35 // pred_check_branch
          %315 = sbr.rel (%p313) target = $region40
        $region39: #{tpu_custom_call.1} parent=35 // pred_region
          %s316 = sand.u32 %s26, 1
          %s317 = scalar_lea.sflag [#allocation12], %s316
          %s318 = sand.u32 %s141, 1
          %s319 = smul.addr %s318, 1536
          %s320 = scalar_lea.vmem [#allocation11], %s319
          %s321 = smul.u32 24, %s26
          %s323 = ssub.s32 24576, 24576
          %324 = vsyncadd %s317, %s323
          %s325 = smul.addr %s321, 128
          %s326 = scalar_lea.hbm %s5, %s325
          %s327 = sshll.u32 %s320, 4
          %s328 = int_to_ptr.vmem [resolvable:$true] %s327
          %333 = dma.hbm_to_vmem [thread:$0]  %s326, 24576, %s328, %s317, 6144, 3072, 192
        $region40: #{tpu_custom_call.1} parent=35 // pred_fallthru
          _
        // Predicated region
        $region41: #{tpu_custom_call.1} parent=35 // pred_check
          %p334 = pneg %p177
        $region42: #{tpu_custom_call.1} parent=35 // pred_check_branch
          %336 = sbr.rel (%p334) target = $region44
        $region43: #{tpu_custom_call.1} parent=35 // pred_region
          %s337 = sand.u32 %s26, 1
          %s338 = scalar_lea.sflag [#allocation12], %s337
          %s339 = sand.u32 %s167, 1
          %s340 = smul.addr %s339, 24
          %s341 = scalar_lea.vmem [#allocation13], %s340
          %s342 = smul.u32 24, %s26
          %s344 = ssub.s32 384, 384
          %345 = vsyncadd %s338, %s344
          %s346 = smul.addr %s342, 16
          %s347 = scalar_lea.hbm %s6, %s346
          %s349 = sshll.u32 %s341, 4
          %s350 = int_to_ptr.vmem [resolvable:$true] %s349
          %352 = dma.hbm_to_vmem [thread:$0]  %s347, 384, %s350, %s338
        $region44: #{tpu_custom_call.1} parent=35 // pred_fallthru
          _
        // Predicated region
        $region45: #{tpu_custom_call.1} parent=35 // pred_check
          %p353 = pneg %p203
        $region46: #{tpu_custom_call.1} parent=35 // pred_check_branch
          %355 = sbr.rel (%p353) target = $region48
        $region47: #{tpu_custom_call.1} parent=35 // pred_region
          %s356 = sand.u32 %s193, 1
          %s357 = scalar_lea.sflag [#allocation15], %s356
          %s358 = sand.u32 %s193, 1
          %s359 = smul.addr %s358, 24
          %s360 = scalar_lea.vmem [#allocation14], %s359
          %s361 = smul.u32 24, %s26
          %s363 = ssub.s32 384, 384
          %364 = vsyncadd %s357, %s363
          %s365 = smul.addr %s361, 16
          %s366 = scalar_lea.hbm %s7, %s365
          %s368 = sshll.u32 %s360, 4
          %s369 = int_to_ptr.vmem [resolvable:$true] %s368
          %371 = dma.hbm_to_vmem [thread:$0]  %s366, 384, %s369, %s357
        $region48: #{tpu_custom_call.1} parent=35 // pred_fallthru
          _
      $region36: #{tpu_custom_call.1} parent=5 // pred_fallthru
        _
      %p372 = scmp.le.s32.totalorder 1, %s26
      %p373 = scmp.lt.s32.totalorder %s26, 3
      %p374 = pnand %p372, %p373
      %p375 = pneg %p374
      // Predicated region
      $region49: #{tpu_custom_call.1} parent=5 // pred_check
        _
      $region50: #{tpu_custom_call.1} parent=5 // pred_check_branch
        %377 = sbr.rel (%p374) target = $region52
      $region51: #{tpu_custom_call.1} parent=5 // pred_region
        %s378 = ssub.s32 %s26, 1
        // Predicated region
        $region53: #{tpu_custom_call.1} parent=51 // pred_check
          %p379 = pneg %p47
        $region54: #{tpu_custom_call.1} parent=51 // pred_check_branch
          %381 = sbr.rel (%p379) target = $region56
        $region55: #{tpu_custom_call.1} parent=51 // pred_region
          %382 = dma.done [#allocation3], 128
        $region56: #{tpu_custom_call.1} parent=51 // pred_fallthru
          _
        // Predicated region
        $region57: #{tpu_custom_call.1} parent=51 // pred_check
          %p383 = pneg %p68
        $region58: #{tpu_custom_call.1} parent=51 // pred_check_branch
          %385 = sbr.rel (%p383) target = $region60
        $region59: #{tpu_custom_call.1} parent=51 // pred_region
          %386 = dma.done [#allocation6], 256
        $region60: #{tpu_custom_call.1} parent=51 // pred_fallthru
          _
        // Predicated region
        $region61: #{tpu_custom_call.1} parent=51 // pred_check
          %p387 = pneg %p89
        $region62: #{tpu_custom_call.1} parent=51 // pred_check_branch
          %389 = sbr.rel (%p387) target = $region64
        $region63: #{tpu_custom_call.1} parent=51 // pred_region
          %390 = dma.done [#allocation6], 32
        $region64: #{tpu_custom_call.1} parent=51 // pred_fallthru
          _
        // Predicated region
        $region65: #{tpu_custom_call.1} parent=51 // pred_check
          %p391 = pneg %p110
        $region66: #{tpu_custom_call.1} parent=51 // pred_check_branch
          %393 = sbr.rel (%p391) target = $region68
        $region67: #{tpu_custom_call.1} parent=51 // pred_region
          %394 = dma.done [#allocation9], 4096
        $region68: #{tpu_custom_call.1} parent=51 // pred_fallthru
          _
        // Predicated region
        $region69: #{tpu_custom_call.1} parent=51 // pred_check
          %p395 = pneg %p131
        $region70: #{tpu_custom_call.1} parent=51 // pred_check_branch
          %397 = sbr.rel (%p395) target = $region72
        $region71: #{tpu_custom_call.1} parent=51 // pred_region
          %398 = dma.done [#allocation9], 32
        $region72: #{tpu_custom_call.1} parent=51 // pred_fallthru
          _
        %s399 = sand.u32 %s31, 1
        %s400 = scalar_lea.sflag [#allocation12], %s399
        %s401 = sand.u32 %s144, 1
        %s402 = smul.addr %s401, 1536
        %s403 = scalar_lea.vmem [#allocation11], %s402
        // Predicated region
        $region73: #{tpu_custom_call.1} parent=51 // pred_check
          %p404 = pneg %p157
        $region74: #{tpu_custom_call.1} parent=51 // pred_check_branch
          %406 = sbr.rel (%p404) target = $region76
        $region75: #{tpu_custom_call.1} parent=51 // pred_region
          %407 = dma.done %s400, 24576
        $region76: #{tpu_custom_call.1} parent=51 // pred_fallthru
          _
        %s408 = sand.u32 %s31, 1
        %s409 = scalar_lea.sflag [#allocation12], %s408
        %s410 = sand.u32 %s170, 1
        %s411 = smul.addr %s410, 24
        %s412 = scalar_lea.vmem [#allocation13], %s411
        // Predicated region
        $region77: #{tpu_custom_call.1} parent=51 // pred_check
          %p413 = pneg %p183
        $region78: #{tpu_custom_call.1} parent=51 // pred_check_branch
          %415 = sbr.rel (%p413) target = $region80
        $region79: #{tpu_custom_call.1} parent=51 // pred_region
          %416 = dma.done %s409, 384
        $region80: #{tpu_custom_call.1} parent=51 // pred_fallthru
          _
        %s417 = sand.u32 %s196, 1
        %s418 = scalar_lea.sflag [#allocation15], %s417
        %s419 = sand.u32 %s196, 1
        %s420 = smul.addr %s419, 24
        %s421 = scalar_lea.vmem [#allocation14], %s420
        // Predicated region
        $region81: #{tpu_custom_call.1} parent=51 // pred_check
          %p422 = pneg %p209
        $region82: #{tpu_custom_call.1} parent=51 // pred_check_branch
          %424 = sbr.rel (%p422) target = $region84
        $region83: #{tpu_custom_call.1} parent=51 // pred_region
          %425 = dma.done %s418, 384
        $region84: #{tpu_custom_call.1} parent=51 // pred_fallthru
          _
        %p426 = pneg %p47
        %p427 = pneg %p44
        %p428 = pneg %p68
        %p429 = pneg %p65
        %p430 = pneg %p89
        %p431 = pneg %p86
        %p432 = pneg %p110
        %p433 = pneg %p107
        %p434 = pneg %p131
        %p435 = pneg %p128
        %s436 = sand.u32 %s31, 1
        %s437 = scalar_lea.sflag [#allocation12], %s436
        %s438 = sand.u32 %s144, 1
        %s439 = smul.addr %s438, 1536
        %s440 = scalar_lea.vmem [#allocation11], %s439
        %p441 = pneg %p157
        %p442 = pneg %p154
        %s443 = sand.u32 %s31, 1
        %s444 = scalar_lea.sflag [#allocation12], %s443
        %s445 = sand.u32 %s170, 1
        %s446 = smul.addr %s445, 24
        %s447 = scalar_lea.vmem [#allocation13], %s446
        %p448 = pneg %p183
        %p449 = pneg %p180
        %s450 = sand.u32 %s196, 1
        %s451 = scalar_lea.sflag [#allocation15], %s450
        %s452 = sand.u32 %s196, 1
        %s453 = smul.addr %s452, 24
        %s454 = scalar_lea.vmem [#allocation14], %s453
        %p455 = pneg %p209
        %p456 = pneg %p206
        %p457 = pneg %p235
        %p458 = pneg %p232
        %s459 = sand.u32 %s222, 1
        %s460 = scalar_lea.sflag [#allocation4], %s459
        %s461 = sand.u32 %s222, 1
        %s462 = smul.addr %s461, 96
        %s463 = scalar_lea.vmem [#allocation16], %s462
        %s464 = smul.u32 24, %s31
        %s465 = smul.u32 24, %s31
        %s466 = smul.u32 24, %s31
        %s467 = smul.u32 24, %s31
        %v469 = vld [vmem:[#allocation2] sm:$0xff]
        %v470 = vpack.c.bf16 %v469, %v469
        %v471 = vld [vmem:[#allocation5] sm:$0xff]
        %v472 = vld [vmem:[#allocation5 + $0x8] sm:$0xff]
        %v473 = vld [vmem:[#allocation7] sm:$0x3]
        %v475 = vlaneseq
        %v476 = vshrl.u32 %v475, 7
        %v477 = vsub.s32 0, %v476
        %v478 = vrot.slane %v473, %v477
        %v479 = vlaneseq
        %v480 = vshrl.u32 %v479, 7
        %v481 = vsub.s32 1, %v480
        %v482 = vrot.slane %v473, %v481
        %v487 = vunpack.c.l.b16 %v471
        %v488 = vunpack.c.h.b16 %v471
        %v489 = vunpack.c.l.b16 %v472
        %v490 = vunpack.c.h.b16 %v472
        %v491 = vpack.c.b16 %v489, %v487
        %v492 = vpack.c.b16 %v490, %v488
        %vm495 = vcmask 130048
        %v497 = vsel %vm495, %v470, 0
        %499 = vmatprep.subr.bf16.mxu0 %v492
        %500 = vmatpush1.bf16.msra.mxu0 %v491
        %501 = vmatprep.subr.bf16.mxu0 0
        %502 = vmatpush1.bf16.msra.mxu0 0
        %503 = vmatprep.subr.bf16.mxu0 0
        %504 = vmatpush1.bf16.msra.mxu0 0
        %505 = vmatprep.subr.bf16.mxu0 0
        %506 = vmatpush1.bf16.msra.mxu0 0
        %507 = vmatprep.subr.bf16.mxu0 0
        %508 = vmatpush1.bf16.msra.mxu0 0
        %509 = vmatprep.subr.bf16.mxu0 0
        %510 = vmatpush1.bf16.msra.mxu0 0
        %511 = vmatprep.subr.bf16.mxu0 0
        %512 = vmatpush1.bf16.msra.mxu0 0
        %513 = vmatprep.subr.bf16.mxu0 0
        %514 = vmatpush1.bf16.msra.mxu0 0
        %515 = vmatprep.subr.bf16.mxu0 0
        %516 = vmatpush1.bf16.msra.mxu0 0
        %517 = vmatprep.subr.bf16.mxu0 0
        %518 = vmatpush1.bf16.msra.mxu0 0
        %519 = vmatprep.subr.bf16.mxu0 0
        %520 = vmatpush1.bf16.msra.mxu0 0
        %521 = vmatprep.subr.bf16.mxu0 0
        %522 = vmatpush1.bf16.msra.mxu0 0
        %523 = vmatprep.subr.bf16.mxu0 0
        %524 = vmatpush1.bf16.msra.mxu0 0
        %525 = vmatprep.subr.bf16.mxu0 0
        %526 = vmatpush1.bf16.msra.mxu0 0
        %527 = vmatprep.subr.bf16.mxu0 0
        %528 = vmatpush1.bf16.msra.mxu0 0
        %529 = vmatprep.subr.bf16.mxu0 0
        %530 = vmatpush1.bf16.msra.mxu0 0
        %531 = vmatprep.mubr.bf16.mxu0 0
        %532 = vmatmul.mubr.bf16.gmra.mrb[0].mxu0 %v497
        %v533 = vpop.f32.mrb[0].mxu0
        %v534 = vadd.f32 %v478, %v533
        %v535 = vpop.f32.mrb[0].mxu0
        %v536 = vadd.f32 %v482, %v535
        %v537 = vpop.f32.mrb[0].mxu0
        %v538 = vpop.f32.mrb[0].mxu0
        %539 = vdwg.mxu0
        %v540 = vmax.f32 %v534, 0.0
        %v541 = vmax.f32 %v536, 0.0
        %v542 = vpack.c.bf16 %v540, %v540
        %v543 = vpack.c.bf16 %v541, %v541
        %v544 = vld [vmem:[#allocation8] sm:$0xff]
        %v545 = vld [vmem:[#allocation8 + $0x8] sm:$0xff]
        %v546 = vld [vmem:[#allocation8 + $0x10] sm:$0xff]
        %v547 = vld [vmem:[#allocation8 + $0x18] sm:$0xff]
        %v548 = vld [vmem:[#allocation8 + $0x20] sm:$0xff]
        %v549 = vld [vmem:[#allocation8 + $0x28] sm:$0xff]
        %v550 = vld [vmem:[#allocation8 + $0x30] sm:$0xff]
        %v551 = vld [vmem:[#allocation8 + $0x38] sm:$0xff]
        %v552 = vld [vmem:[#allocation8 + $0x40] sm:$0xff]
        %v553 = vld [vmem:[#allocation8 + $0x48] sm:$0xff]
        %v554 = vld [vmem:[#allocation8 + $0x50] sm:$0xff]
        %v555 = vld [vmem:[#allocation8 + $0x58] sm:$0xff]
        %v556 = vld [vmem:[#allocation8 + $0x60] sm:$0xff]
        %v557 = vld [vmem:[#allocation8 + $0x68] sm:$0xff]
        %v558 = vld [vmem:[#allocation8 + $0x70] sm:$0xff]
        %v559 = vld [vmem:[#allocation8 + $0x78] sm:$0xff]
        %v560 = vld [vmem:[#allocation8 + $0x80] sm:$0xff]
        %v561 = vld [vmem:[#allocation8 + $0x88] sm:$0xff]
        %v562 = vld [vmem:[#allocation8 + $0x90] sm:$0xff]
        %v563 = vld [vmem:[#allocation8 + $0x98] sm:$0xff]
        %v564 = vld [vmem:[#allocation8 + $0xa0] sm:$0xff]
        %v565 = vld [vmem:[#allocation8 + $0xa8] sm:$0xff]
        %v566 = vld [vmem:[#allocation8 + $0xb0] sm:$0xff]
        %v567 = vld [vmem:[#allocation8 + $0xb8] sm:$0xff]
        %v568 = vld [vmem:[#allocation8 + $0xc0] sm:$0xff]
        %v569 = vld [vmem:[#allocation8 + $0xc8] sm:$0xff]
        %v570 = vld [vmem:[#allocation8 + $0xd0] sm:$0xff]
        %v571 = vld [vmem:[#allocation8 + $0xd8] sm:$0xff]
        %v572 = vld [vmem:[#allocation8 + $0xe0] sm:$0xff]
        %v573 = vld [vmem:[#allocation8 + $0xe8] sm:$0xff]
        %v574 = vld [vmem:[#allocation8 + $0xf0] sm:$0xff]
        %v575 = vld [vmem:[#allocation8 + $0xf8] sm:$0xff]
        %v576 = vld [vmem:[#allocation10] sm:$0x3]
        %v578 = vlaneseq
        %v579 = vshrl.u32 %v578, 7
        %v580 = vsub.s32 0, %v579
        %v581 = vrot.slane %v576, %v580
        %v582 = vlaneseq
        %v583 = vshrl.u32 %v582, 7
        %v584 = vsub.s32 1, %v583
        %v585 = vrot.slane %v576, %v584
        %v620 = vunpack.c.l.b16 %v544
        %v621 = vunpack.c.h.b16 %v544
        %v622 = vunpack.c.l.b16 %v545
        %v623 = vunpack.c.h.b16 %v545
        %v624 = vunpack.c.l.b16 %v546
        %v625 = vunpack.c.h.b16 %v546
        %v626 = vunpack.c.l.b16 %v547
        %v627 = vunpack.c.h.b16 %v547
        %v628 = vunpack.c.l.b16 %v548
        %v629 = vunpack.c.h.b16 %v548
        %v630 = vunpack.c.l.b16 %v549
        %v631 = vunpack.c.h.b16 %v549
        %v632 = vunpack.c.l.b16 %v550
        %v633 = vunpack.c.h.b16 %v550
        %v634 = vunpack.c.l.b16 %v551
        %v635 = vunpack.c.h.b16 %v551
        %v636 = vunpack.c.l.b16 %v552
        %v637 = vunpack.c.h.b16 %v552
        %v638 = vunpack.c.l.b16 %v553
        %v639 = vunpack.c.h.b16 %v553
        %v640 = vunpack.c.l.b16 %v554
        %v641 = vunpack.c.h.b16 %v554
        %v642 = vunpack.c.l.b16 %v555
        %v643 = vunpack.c.h.b16 %v555
        %v644 = vunpack.c.l.b16 %v556
        %v645 = vunpack.c.h.b16 %v556
        %v646 = vunpack.c.l.b16 %v557
        %v647 = vunpack.c.h.b16 %v557
        %v648 = vunpack.c.l.b16 %v558
        %v649 = vunpack.c.h.b16 %v558
        %v650 = vunpack.c.l.b16 %v559
        %v651 = vunpack.c.h.b16 %v559
        %v652 = vunpack.c.l.b16 %v560
        %v653 = vunpack.c.h.b16 %v560
        %v654 = vunpack.c.l.b16 %v561
        %v655 = vunpack.c.h.b16 %v561
        %v656 = vunpack.c.l.b16 %v562
        %v657 = vunpack.c.h.b16 %v562
        %v658 = vunpack.c.l.b16 %v563
        %v659 = vunpack.c.h.b16 %v563
        %v660 = vunpack.c.l.b16 %v564
        %v661 = vunpack.c.h.b16 %v564
        %v662 = vunpack.c.l.b16 %v565
        %v663 = vunpack.c.h.b16 %v565
        %v664 = vunpack.c.l.b16 %v566
        %v665 = vunpack.c.h.b16 %v566
        %v666 = vunpack.c.l.b16 %v567
        %v667 = vunpack.c.h.b16 %v567
        %v668 = vunpack.c.l.b16 %v568
        %v669 = vunpack.c.h.b16 %v568
        %v670 = vunpack.c.l.b16 %v569
        %v671 = vunpack.c.h.b16 %v569
        %v672 = vunpack.c.l.b16 %v570
        %v673 = vunpack.c.h.b16 %v570
        %v674 = vunpack.c.l.b16 %v571
        %v675 = vunpack.c.h.b16 %v571
        %v676 = vunpack.c.l.b16 %v572
        %v677 = vunpack.c.h.b16 %v572
        %v678 = vunpack.c.l.b16 %v573
        %v679 = vunpack.c.h.b16 %v573
        %v680 = vunpack.c.l.b16 %v574
        %v681 = vunpack.c.h.b16 %v574
        %v682 = vunpack.c.l.b16 %v575
        %v683 = vunpack.c.h.b16 %v575
        %v684 = vpack.c.b16 %v622, %v620
        %v685 = vpack.c.b16 %v623, %v621
        %v686 = vpack.c.b16 %v626, %v624
        %v687 = vpack.c.b16 %v627, %v625
        %v688 = vpack.c.b16 %v630, %v628
        %v689 = vpack.c.b16 %v631, %v629
        %v690 = vpack.c.b16 %v634, %v632
        %v691 = vpack.c.b16 %v635, %v633
        %v692 = vpack.c.b16 %v638, %v636
        %v693 = vpack.c.b16 %v639, %v637
        %v694 = vpack.c.b16 %v642, %v640
        %v695 = vpack.c.b16 %v643, %v641
        %v696 = vpack.c.b16 %v646, %v644
        %v697 = vpack.c.b16 %v647, %v645
        %v698 = vpack.c.b16 %v650, %v648
        %v699 = vpack.c.b16 %v651, %v649
        %v700 = vpack.c.b16 %v654, %v652
        %v701 = vpack.c.b16 %v655, %v653
        %v702 = vpack.c.b16 %v658, %v656
        %v703 = vpack.c.b16 %v659, %v657
        %v704 = vpack.c.b16 %v662, %v660
        %v705 = vpack.c.b16 %v663, %v661
        %v706 = vpack.c.b16 %v666, %v664
        %v707 = vpack.c.b16 %v667, %v665
        %v708 = vpack.c.b16 %v670, %v668
        %v709 = vpack.c.b16 %v671, %v669
        %v710 = vpack.c.b16 %v674, %v672
        %v711 = vpack.c.b16 %v675, %v673
        %v712 = vpack.c.b16 %v678, %v676
        %v713 = vpack.c.b16 %v679, %v677
        %v714 = vpack.c.b16 %v682, %v680
        %v715 = vpack.c.b16 %v683, %v681
        %748 = vmatprep.subr.bf16.mxu0 %v685
        %749 = vmatpush1.bf16.msra.mxu0 %v684
        %750 = vmatprep.subr.bf16.mxu0 %v687
        %751 = vmatpush1.bf16.msra.mxu0 %v686
        %752 = vmatprep.subr.bf16.mxu0 %v689
        %753 = vmatpush1.bf16.msra.mxu0 %v688
        %754 = vmatprep.subr.bf16.mxu0 %v691
        %755 = vmatpush1.bf16.msra.mxu0 %v690
        %756 = vmatprep.subr.bf16.mxu0 %v693
        %757 = vmatpush1.bf16.msra.mxu0 %v692
        %758 = vmatprep.subr.bf16.mxu0 %v695
        %759 = vmatpush1.bf16.msra.mxu0 %v694
        %760 = vmatprep.subr.bf16.mxu0 %v697
        %761 = vmatpush1.bf16.msra.mxu0 %v696
        %762 = vmatprep.subr.bf16.mxu0 %v699
        %763 = vmatpush1.bf16.msra.mxu0 %v698
        %764 = vmatprep.subr.bf16.mxu0 %v701
        %765 = vmatpush1.bf16.msra.mxu0 %v700
        %766 = vmatprep.subr.bf16.mxu0 %v703
        %767 = vmatpush1.bf16.msra.mxu0 %v702
        %768 = vmatprep.subr.bf16.mxu0 %v705
        %769 = vmatpush1.bf16.msra.mxu0 %v704
        %770 = vmatprep.subr.bf16.mxu0 %v707
        %771 = vmatpush1.bf16.msra.mxu0 %v706
        %772 = vmatprep.subr.bf16.mxu0 %v709
        %773 = vmatpush1.bf16.msra.mxu0 %v708
        %774 = vmatprep.subr.bf16.mxu0 %v711
        %775 = vmatpush1.bf16.msra.mxu0 %v710
        %776 = vmatprep.subr.bf16.mxu0 %v713
        %777 = vmatpush1.bf16.msra.mxu0 %v712
        %778 = vmatprep.subr.bf16.mxu0 %v715
        %779 = vmatpush1.bf16.msra.mxu0 %v714
        %780 = vmatprep.mubr.bf16.mxu0 %v543
        %781 = vmatmul.mubr.bf16.gmra.mrb[0].mxu0 %v542
        %v782 = vpop.f32.mrb[0].mxu0
        %v783 = vadd.f32 %v581, %v782
        %v784 = vpop.f32.mrb[0].mxu0
        %v785 = vadd.f32 %v585, %v784
        %v786 = vpop.f32.mrb[0].mxu0
        %v787 = vpop.f32.mrb[0].mxu0
        %788 = vdwg.mxu0
        %v789 = vmax.f32 %v783, 0.0
        %v790 = vmax.f32 %v785, 0.0
        %v791 = vld [vmem:[%s403] sm:$0xff]
        %v792 = vld [vmem:[%s403 + $0x8] sm:$0xff]
        %v793 = vld [vmem:[%s403 + $0x10] sm:$0xff]
        %v794 = vld [vmem:[%s403 + $0x18] sm:$0xff]
        %v795 = vld [vmem:[%s403 + $0x20] sm:$0xff]
        %v796 = vld [vmem:[%s403 + $0x28] sm:$0xff]
        %v797 = vld [vmem:[%s403 + $0x30] sm:$0xff]
        %v798 = vld [vmem:[%s403 + $0x38] sm:$0xff]
        %v799 = vld [vmem:[%s403 + $0x40] sm:$0xff]
        %v800 = vld [vmem:[%s403 + $0x48] sm:$0xff]
        %v801 = vld [vmem:[%s403 + $0x50] sm:$0xff]
        %v802 = vld [vmem:[%s403 + $0x58] sm:$0xff]
        %v803 = vld [vmem:[%s403 + $0x60] sm:$0xff]
        %v804 = vld [vmem:[%s403 + $0x68] sm:$0xff]
        %v805 = vld [vmem:[%s403 + $0x70] sm:$0xff]
        %v806 = vld [vmem:[%s403 + $0x78] sm:$0xff]
        %v807 = vld [vmem:[%s403 + $0x80] sm:$0xff]
        %v808 = vld [vmem:[%s403 + $0x88] sm:$0xff]
        %v809 = vld [vmem:[%s403 + $0x90] sm:$0xff]
        %v810 = vld [vmem:[%s403 + $0x98] sm:$0xff]
        %v811 = vld [vmem:[%s403 + $0xa0] sm:$0xff]
        %v812 = vld [vmem:[%s403 + $0xa8] sm:$0xff]
        %v813 = vld [vmem:[%s403 + $0xb0] sm:$0xff]
        %v814 = vld [vmem:[%s403 + $0xb8] sm:$0xff]
        %v815 = vld [vmem:[%s403 + $0xc0] sm:$0xff]
        %v816 = vld [vmem:[%s403 + $0xc8] sm:$0xff]
        %v817 = vld [vmem:[%s403 + $0xd0] sm:$0xff]
        %v818 = vld [vmem:[%s403 + $0xd8] sm:$0xff]
        %v819 = vld [vmem:[%s403 + $0xe0] sm:$0xff]
        %v820 = vld [vmem:[%s403 + $0xe8] sm:$0xff]
        %v821 = vld [vmem:[%s403 + $0xf0] sm:$0xff]
        %v822 = vld [vmem:[%s403 + $0xf8] sm:$0xff]
        %v823 = vld [vmem:[%s403 + $0x100] sm:$0xff]
        %v824 = vld [vmem:[%s403 + $0x108] sm:$0xff]
        %v825 = vld [vmem:[%s403 + $0x110] sm:$0xff]
        %v826 = vld [vmem:[%s403 + $0x118] sm:$0xff]
        %v827 = vld [vmem:[%s403 + $0x120] sm:$0xff]
        %v828 = vld [vmem:[%s403 + $0x128] sm:$0xff]
        %v829 = vld [vmem:[%s403 + $0x130] sm:$0xff]
        %v830 = vld [vmem:[%s403 + $0x138] sm:$0xff]
        %v831 = vld [vmem:[%s403 + $0x140] sm:$0xff]
        %v832 = vld [vmem:[%s403 + $0x148] sm:$0xff]
        %v833 = vld [vmem:[%s403 + $0x150] sm:$0xff]
        %v834 = vld [vmem:[%s403 + $0x158] sm:$0xff]
        %v835 = vld [vmem:[%s403 + $0x160] sm:$0xff]
        %v836 = vld [vmem:[%s403 + $0x168] sm:$0xff]
        %v837 = vld [vmem:[%s403 + $0x170] sm:$0xff]
        %v838 = vld [vmem:[%s403 + $0x178] sm:$0xff]
        %v839 = vld [vmem:[%s403 + $0x180] sm:$0xff]
        %v840 = vld [vmem:[%s403 + $0x188] sm:$0xff]
        %v841 = vld [vmem:[%s403 + $0x190] sm:$0xff]
        %v842 = vld [vmem:[%s403 + $0x198] sm:$0xff]
        %v843 = vld [vmem:[%s403 + $0x1a0] sm:$0xff]
        %v844 = vld [vmem:[%s403 + $0x1a8] sm:$0xff]
        %v845 = vld [vmem:[%s403 + $0x1b0] sm:$0xff]
        %v846 = vld [vmem:[%s403 + $0x1b8] sm:$0xff]
        %v847 = vld [vmem:[%s403 + $0x1c0] sm:$0xff]
        %v848 = vld [vmem:[%s403 + $0x1c8] sm:$0xff]
        %v849 = vld [vmem:[%s403 + $0x1d0] sm:$0xff]
        %v850 = vld [vmem:[%s403 + $0x1d8] sm:$0xff]
        %v851 = vld [vmem:[%s403 + $0x1e0] sm:$0xff]
        %v852 = vld [vmem:[%s403 + $0x1e8] sm:$0xff]
        %v853 = vld [vmem:[%s403 + $0x1f0] sm:$0xff]
        %v854 = vld [vmem:[%s403 + $0x1f8] sm:$0xff]
        %v855 = vld [vmem:[%s403 + $0x200] sm:$0xff]
        %v856 = vld [vmem:[%s403 + $0x208] sm:$0xff]
        %v857 = vld [vmem:[%s403 + $0x210] sm:$0xff]
        %v858 = vld [vmem:[%s403 + $0x218] sm:$0xff]
        %v859 = vld [vmem:[%s403 + $0x220] sm:$0xff]
        %v860 = vld [vmem:[%s403 + $0x228] sm:$0xff]
        %v861 = vld [vmem:[%s403 + $0x230] sm:$0xff]
        %v862 = vld [vmem:[%s403 + $0x238] sm:$0xff]
        %v863 = vld [vmem:[%s403 + $0x240] sm:$0xff]
        %v864 = vld [vmem:[%s403 + $0x248] sm:$0xff]
        %v865 = vld [vmem:[%s403 + $0x250] sm:$0xff]
        %v866 = vld [vmem:[%s403 + $0x258] sm:$0xff]
        %v867 = vld [vmem:[%s403 + $0x260] sm:$0xff]
        %v868 = vld [vmem:[%s403 + $0x268] sm:$0xff]
        %v869 = vld [vmem:[%s403 + $0x270] sm:$0xff]
        %v870 = vld [vmem:[%s403 + $0x278] sm:$0xff]
        %v871 = vld [vmem:[%s403 + $0x280] sm:$0xff]
        %v872 = vld [vmem:[%s403 + $0x288] sm:$0xff]
        %v873 = vld [vmem:[%s403 + $0x290] sm:$0xff]
        %v874 = vld [vmem:[%s403 + $0x298] sm:$0xff]
        %v875 = vld [vmem:[%s403 + $0x2a0] sm:$0xff]
        %v876 = vld [vmem:[%s403 + $0x2a8] sm:$0xff]
        %v877 = vld [vmem:[%s403 + $0x2b0] sm:$0xff]
        %v878 = vld [vmem:[%s403 + $0x2b8] sm:$0xff]
        %v879 = vld [vmem:[%s403 + $0x2c0] sm:$0xff]
        %v880 = vld [vmem:[%s403 + $0x2c8] sm:$0xff]
        %v881 = vld [vmem:[%s403 + $0x2d0] sm:$0xff]
        %v882 = vld [vmem:[%s403 + $0x2d8] sm:$0xff]
        %v883 = vld [vmem:[%s403 + $0x2e0] sm:$0xff]
        %v884 = vld [vmem:[%s403 + $0x2e8] sm:$0xff]
        %v885 = vld [vmem:[%s403 + $0x2f0] sm:$0xff]
        %v886 = vld [vmem:[%s403 + $0x2f8] sm:$0xff]
        %v887 = vld [vmem:[%s403 + $0x300] sm:$0xff]
        %v888 = vld [vmem:[%s403 + $0x308] sm:$0xff]
        %v889 = vld [vmem:[%s403 + $0x310] sm:$0xff]
        %v890 = vld [vmem:[%s403 + $0x318] sm:$0xff]
        %v891 = vld [vmem:[%s403 + $0x320] sm:$0xff]
        %v892 = vld [vmem:[%s403 + $0x328] sm:$0xff]
        %v893 = vld [vmem:[%s403 + $0x330] sm:$0xff]
        %v894 = vld [vmem:[%s403 + $0x338] sm:$0xff]
        %v895 = vld [vmem:[%s403 + $0x340] sm:$0xff]
        %v896 = vld [vmem:[%s403 + $0x348] sm:$0xff]
        %v897 = vld [vmem:[%s403 + $0x350] sm:$0xff]
        %v898 = vld [vmem:[%s403 + $0x358] sm:$0xff]
        %v899 = vld [vmem:[%s403 + $0x360] sm:$0xff]
        %v900 = vld [vmem:[%s403 + $0x368] sm:$0xff]
        %v901 = vld [vmem:[%s403 + $0x370] sm:$0xff]
        %v902 = vld [vmem:[%s403 + $0x378] sm:$0xff]
        %v903 = vld [vmem:[%s403 + $0x380] sm:$0xff]
        %v904 = vld [vmem:[%s403 + $0x388] sm:$0xff]
        %v905 = vld [vmem:[%s403 + $0x390] sm:$0xff]
        %v906 = vld [vmem:[%s403 + $0x398] sm:$0xff]
        %v907 = vld [vmem:[%s403 + $0x3a0] sm:$0xff]
        %v908 = vld [vmem:[%s403 + $0x3a8] sm:$0xff]
        %v909 = vld [vmem:[%s403 + $0x3b0] sm:$0xff]
        %v910 = vld [vmem:[%s403 + $0x3b8] sm:$0xff]
        %v911 = vld [vmem:[%s403 + $0x3c0] sm:$0xff]
        %v912 = vld [vmem:[%s403 + $0x3c8] sm:$0xff]
        %v913 = vld [vmem:[%s403 + $0x3d0] sm:$0xff]
        %v914 = vld [vmem:[%s403 + $0x3d8] sm:$0xff]
        %v915 = vld [vmem:[%s403 + $0x3e0] sm:$0xff]
        %v916 = vld [vmem:[%s403 + $0x3e8] sm:$0xff]
        %v917 = vld [vmem:[%s403 + $0x3f0] sm:$0xff]
        %v918 = vld [vmem:[%s403 + $0x3f8] sm:$0xff]
        %v919 = vld [vmem:[%s403 + $0x400] sm:$0xff]
        %v920 = vld [vmem:[%s403 + $0x408] sm:$0xff]
        %v921 = vld [vmem:[%s403 + $0x410] sm:$0xff]
        %v922 = vld [vmem:[%s403 + $0x418] sm:$0xff]
        %v923 = vld [vmem:[%s403 + $0x420] sm:$0xff]
        %v924 = vld [vmem:[%s403 + $0x428] sm:$0xff]
        %v925 = vld [vmem:[%s403 + $0x430] sm:$0xff]
        %v926 = vld [vmem:[%s403 + $0x438] sm:$0xff]
        %v927 = vld [vmem:[%s403 + $0x440] sm:$0xff]
        %v928 = vld [vmem:[%s403 + $0x448] sm:$0xff]
        %v929 = vld [vmem:[%s403 + $0x450] sm:$0xff]
        %v930 = vld [vmem:[%s403 + $0x458] sm:$0xff]
        %v931 = vld [vmem:[%s403 + $0x460] sm:$0xff]
        %v932 = vld [vmem:[%s403 + $0x468] sm:$0xff]
        %v933 = vld [vmem:[%s403 + $0x470] sm:$0xff]
        %v934 = vld [vmem:[%s403 + $0x478] sm:$0xff]
        %v935 = vld [vmem:[%s403 + $0x480] sm:$0xff]
        %v936 = vld [vmem:[%s403 + $0x488] sm:$0xff]
        %v937 = vld [vmem:[%s403 + $0x490] sm:$0xff]
        %v938 = vld [vmem:[%s403 + $0x498] sm:$0xff]
        %v939 = vld [vmem:[%s403 + $0x4a0] sm:$0xff]
        %v940 = vld [vmem:[%s403 + $0x4a8] sm:$0xff]
        %v941 = vld [vmem:[%s403 + $0x4b0] sm:$0xff]
        %v942 = vld [vmem:[%s403 + $0x4b8] sm:$0xff]
        %v943 = vld [vmem:[%s403 + $0x4c0] sm:$0xff]
        %v944 = vld [vmem:[%s403 + $0x4c8] sm:$0xff]
        %v945 = vld [vmem:[%s403 + $0x4d0] sm:$0xff]
        %v946 = vld [vmem:[%s403 + $0x4d8] sm:$0xff]
        %v947 = vld [vmem:[%s403 + $0x4e0] sm:$0xff]
        %v948 = vld [vmem:[%s403 + $0x4e8] sm:$0xff]
        %v949 = vld [vmem:[%s403 + $0x4f0] sm:$0xff]
        %v950 = vld [vmem:[%s403 + $0x4f8] sm:$0xff]
        %v951 = vld [vmem:[%s403 + $0x500] sm:$0xff]
        %v952 = vld [vmem:[%s403 + $0x508] sm:$0xff]
        %v953 = vld [vmem:[%s403 + $0x510] sm:$0xff]
        %v954 = vld [vmem:[%s403 + $0x518] sm:$0xff]
        %v955 = vld [vmem:[%s403 + $0x520] sm:$0xff]
        %v956 = vld [vmem:[%s403 + $0x528] sm:$0xff]
        %v957 = vld [vmem:[%s403 + $0x530] sm:$0xff]
        %v958 = vld [vmem:[%s403 + $0x538] sm:$0xff]
        %v959 = vld [vmem:[%s403 + $0x540] sm:$0xff]
        %v960 = vld [vmem:[%s403 + $0x548] sm:$0xff]
        %v961 = vld [vmem:[%s403 + $0x550] sm:$0xff]
        %v962 = vld [vmem:[%s403 + $0x558] sm:$0xff]
        %v963 = vld [vmem:[%s403 + $0x560] sm:$0xff]
        %v964 = vld [vmem:[%s403 + $0x568] sm:$0xff]
        %v965 = vld [vmem:[%s403 + $0x570] sm:$0xff]
        %v966 = vld [vmem:[%s403 + $0x578] sm:$0xff]
        %v967 = vld [vmem:[%s403 + $0x580] sm:$0xff]
        %v968 = vld [vmem:[%s403 + $0x588] sm:$0xff]
        %v969 = vld [vmem:[%s403 + $0x590] sm:$0xff]
        %v970 = vld [vmem:[%s403 + $0x598] sm:$0xff]
        %v971 = vld [vmem:[%s403 + $0x5a0] sm:$0xff]
        %v972 = vld [vmem:[%s403 + $0x5a8] sm:$0xff]
        %v973 = vld [vmem:[%s403 + $0x5b0] sm:$0xff]
        %v974 = vld [vmem:[%s403 + $0x5b8] sm:$0xff]
        %v975 = vld [vmem:[%s403 + $0x5c0] sm:$0xff]
        %v976 = vld [vmem:[%s403 + $0x5c8] sm:$0xff]
        %v977 = vld [vmem:[%s403 + $0x5d0] sm:$0xff]
        %v978 = vld [vmem:[%s403 + $0x5d8] sm:$0xff]
        %v979 = vld [vmem:[%s403 + $0x5e0] sm:$0xff]
        %v980 = vld [vmem:[%s403 + $0x5e8] sm:$0xff]
        %v981 = vld [vmem:[%s403 + $0x5f0] sm:$0xff]
        %v982 = vld [vmem:[%s403 + $0x5f8] sm:$0xff]
        %v983 = vunpack.c.l.s8.bf16 %v791
        %v984 = vunpack.c.l.s8.bf16 %v792
        %v985 = vunpack.c.l.s8.bf16 %v793
        %v986 = vunpack.c.l.s8.bf16 %v794
        %v987 = vunpack.c.l.s8.bf16 %v795
        %v988 = vunpack.c.l.s8.bf16 %v796
        %v989 = vunpack.c.l.s8.bf16 %v797
        %v990 = vunpack.c.l.s8.bf16 %v798
        %v991 = vunpack.c.l.s8.bf16 %v799
        %v992 = vunpack.c.l.s8.bf16 %v800
        %v993 = vunpack.c.l.s8.bf16 %v801
        %v994 = vunpack.c.l.s8.bf16 %v802
        %v995 = vunpack.c.l.s8.bf16 %v803
        %v996 = vunpack.c.l.s8.bf16 %v804
        %v997 = vunpack.c.l.s8.bf16 %v805
        %v998 = vunpack.c.l.s8.bf16 %v806
        %v999 = vunpack.c.l.s8.bf16 %v807
        %v1000 = vunpack.c.l.s8.bf16 %v808
        %v1001 = vunpack.c.l.s8.bf16 %v809
        %v1002 = vunpack.c.l.s8.bf16 %v810
        %v1003 = vunpack.c.l.s8.bf16 %v811
        %v1004 = vunpack.c.l.s8.bf16 %v812
        %v1005 = vunpack.c.l.s8.bf16 %v813
        %v1006 = vunpack.c.l.s8.bf16 %v814
        %v1007 = vunpack.c.h.s8.bf16 %v791
        %v1008 = vunpack.c.h.s8.bf16 %v792
        %v1009 = vunpack.c.h.s8.bf16 %v793
        %v1010 = vunpack.c.h.s8.bf16 %v794
        %v1011 = vunpack.c.h.s8.bf16 %v795
        %v1012 = vunpack.c.h.s8.bf16 %v796
        %v1013 = vunpack.c.h.s8.bf16 %v797
        %v1014 = vunpack.c.h.s8.bf16 %v798
        %v1015 = vunpack.c.h.s8.bf16 %v799
        %v1016 = vunpack.c.h.s8.bf16 %v800
        %v1017 = vunpack.c.h.s8.bf16 %v801
        %v1018 = vunpack.c.h.s8.bf16 %v802
        %v1019 = vunpack.c.h.s8.bf16 %v803
        %v1020 = vunpack.c.h.s8.bf16 %v804
        %v1021 = vunpack.c.h.s8.bf16 %v805
        %v1022 = vunpack.c.h.s8.bf16 %v806
        %v1023 = vunpack.c.h.s8.bf16 %v807
        %v1024 = vunpack.c.h.s8.bf16 %v808
        %v1025 = vunpack.c.h.s8.bf16 %v809
        %v1026 = vunpack.c.h.s8.bf16 %v810
        %v1027 = vunpack.c.h.s8.bf16 %v811
        %v1028 = vunpack.c.h.s8.bf16 %v812
        %v1029 = vunpack.c.h.s8.bf16 %v813
        %v1030 = vunpack.c.h.s8.bf16 %v814
        %v1031 = vunpack.c.l.s8.bf16 %v815
        %v1032 = vunpack.c.l.s8.bf16 %v816
        %v1033 = vunpack.c.l.s8.bf16 %v817
        %v1034 = vunpack.c.l.s8.bf16 %v818
        %v1035 = vunpack.c.l.s8.bf16 %v819
        %v1036 = vunpack.c.l.s8.bf16 %v820
        %v1037 = vunpack.c.l.s8.bf16 %v821
        %v1038 = vunpack.c.l.s8.bf16 %v822
        %v1039 = vunpack.c.l.s8.bf16 %v823
        %v1040 = vunpack.c.l.s8.bf16 %v824
        %v1041 = vunpack.c.l.s8.bf16 %v825
        %v1042 = vunpack.c.l.s8.bf16 %v826
        %v1043 = vunpack.c.l.s8.bf16 %v827
        %v1044 = vunpack.c.l.s8.bf16 %v828
        %v1045 = vunpack.c.l.s8.bf16 %v829
        %v1046 = vunpack.c.l.s8.bf16 %v830
        %v1047 = vunpack.c.l.s8.bf16 %v831
        %v1048 = vunpack.c.l.s8.bf16 %v832
        %v1049 = vunpack.c.l.s8.bf16 %v833
        %v1050 = vunpack.c.l.s8.bf16 %v834
        %v1051 = vunpack.c.l.s8.bf16 %v835
        %v1052 = vunpack.c.l.s8.bf16 %v836
        %v1053 = vunpack.c.l.s8.bf16 %v837
        %v1054 = vunpack.c.l.s8.bf16 %v838
        %v1055 = vunpack.c.h.s8.bf16 %v815
        %v1056 = vunpack.c.h.s8.bf16 %v816
        %v1057 = vunpack.c.h.s8.bf16 %v817
        %v1058 = vunpack.c.h.s8.bf16 %v818
        %v1059 = vunpack.c.h.s8.bf16 %v819
        %v1060 = vunpack.c.h.s8.bf16 %v820
        %v1061 = vunpack.c.h.s8.bf16 %v821
        %v1062 = vunpack.c.h.s8.bf16 %v822
        %v1063 = vunpack.c.h.s8.bf16 %v823
        %v1064 = vunpack.c.h.s8.bf16 %v824
        %v1065 = vunpack.c.h.s8.bf16 %v825
        %v1066 = vunpack.c.h.s8.bf16 %v826
        %v1067 = vunpack.c.h.s8.bf16 %v827
        %v1068 = vunpack.c.h.s8.bf16 %v828
        %v1069 = vunpack.c.h.s8.bf16 %v829
        %v1070 = vunpack.c.h.s8.bf16 %v830
        %v1071 = vunpack.c.h.s8.bf16 %v831
        %v1072 = vunpack.c.h.s8.bf16 %v832
        %v1073 = vunpack.c.h.s8.bf16 %v833
        %v1074 = vunpack.c.h.s8.bf16 %v834
        %v1075 = vunpack.c.h.s8.bf16 %v835
        %v1076 = vunpack.c.h.s8.bf16 %v836
        %v1077 = vunpack.c.h.s8.bf16 %v837
        %v1078 = vunpack.c.h.s8.bf16 %v838
        %v1079 = vunpack.c.l.s8.bf16 %v839
        %v1080 = vunpack.c.l.s8.bf16 %v840
        %v1081 = vunpack.c.l.s8.bf16 %v841
        %v1082 = vunpack.c.l.s8.bf16 %v842
        %v1083 = vunpack.c.l.s8.bf16 %v843
        %v1084 = vunpack.c.l.s8.bf16 %v844
        %v1085 = vunpack.c.l.s8.bf16 %v845
        %v1086 = vunpack.c.l.s8.bf16 %v846
        %v1087 = vunpack.c.l.s8.bf16 %v847
        %v1088 = vunpack.c.l.s8.bf16 %v848
        %v1089 = vunpack.c.l.s8.bf16 %v849
        %v1090 = vunpack.c.l.s8.bf16 %v850
        %v1091 = vunpack.c.l.s8.bf16 %v851
        %v1092 = vunpack.c.l.s8.bf16 %v852
        %v1093 = vunpack.c.l.s8.bf16 %v853
        %v1094 = vunpack.c.l.s8.bf16 %v854
        %v1095 = vunpack.c.l.s8.bf16 %v855
        %v1096 = vunpack.c.l.s8.bf16 %v856
        %v1097 = vunpack.c.l.s8.bf16 %v857
        %v1098 = vunpack.c.l.s8.bf16 %v858
        %v1099 = vunpack.c.l.s8.bf16 %v859
        %v1100 = vunpack.c.l.s8.bf16 %v860
        %v1101 = vunpack.c.l.s8.bf16 %v861
        %v1102 = vunpack.c.l.s8.bf16 %v862
        %v1103 = vunpack.c.h.s8.bf16 %v839
        %v1104 = vunpack.c.h.s8.bf16 %v840
        %v1105 = vunpack.c.h.s8.bf16 %v841
        %v1106 = vunpack.c.h.s8.bf16 %v842
        %v1107 = vunpack.c.h.s8.bf16 %v843
        %v1108 = vunpack.c.h.s8.bf16 %v844
        %v1109 = vunpack.c.h.s8.bf16 %v845
        %v1110 = vunpack.c.h.s8.bf16 %v846
        %v1111 = vunpack.c.h.s8.bf16 %v847
        %v1112 = vunpack.c.h.s8.bf16 %v848
        %v1113 = vunpack.c.h.s8.bf16 %v849
        %v1114 = vunpack.c.h.s8.bf16 %v850
        %v1115 = vunpack.c.h.s8.bf16 %v851
        %v1116 = vunpack.c.h.s8.bf16 %v852
        %v1117 = vunpack.c.h.s8.bf16 %v853
        %v1118 = vunpack.c.h.s8.bf16 %v854
        %v1119 = vunpack.c.h.s8.bf16 %v855
        %v1120 = vunpack.c.h.s8.bf16 %v856
        %v1121 = vunpack.c.h.s8.bf16 %v857
        %v1122 = vunpack.c.h.s8.bf16 %v858
        %v1123 = vunpack.c.h.s8.bf16 %v859
        %v1124 = vunpack.c.h.s8.bf16 %v860
        %v1125 = vunpack.c.h.s8.bf16 %v861
        %v1126 = vunpack.c.h.s8.bf16 %v862
        %v1127 = vunpack.c.l.s8.bf16 %v863
        %v1128 = vunpack.c.l.s8.bf16 %v864
        %v1129 = vunpack.c.l.s8.bf16 %v865
        %v1130 = vunpack.c.l.s8.bf16 %v866
        %v1131 = vunpack.c.l.s8.bf16 %v867
        %v1132 = vunpack.c.l.s8.bf16 %v868
        %v1133 = vunpack.c.l.s8.bf16 %v869
        %v1134 = vunpack.c.l.s8.bf16 %v870
        %v1135 = vunpack.c.l.s8.bf16 %v871
        %v1136 = vunpack.c.l.s8.bf16 %v872
        %v1137 = vunpack.c.l.s8.bf16 %v873
        %v1138 = vunpack.c.l.s8.bf16 %v874
        %v1139 = vunpack.c.l.s8.bf16 %v875
        %v1140 = vunpack.c.l.s8.bf16 %v876
        %v1141 = vunpack.c.l.s8.bf16 %v877
        %v1142 = vunpack.c.l.s8.bf16 %v878
        %v1143 = vunpack.c.l.s8.bf16 %v879
        %v1144 = vunpack.c.l.s8.bf16 %v880
        %v1145 = vunpack.c.l.s8.bf16 %v881
        %v1146 = vunpack.c.l.s8.bf16 %v882
        %v1147 = vunpack.c.l.s8.bf16 %v883
        %v1148 = vunpack.c.l.s8.bf16 %v884
        %v1149 = vunpack.c.l.s8.bf16 %v885
        %v1150 = vunpack.c.l.s8.bf16 %v886
        %v1151 = vunpack.c.h.s8.bf16 %v863
        %v1152 = vunpack.c.h.s8.bf16 %v864
        %v1153 = vunpack.c.h.s8.bf16 %v865
        %v1154 = vunpack.c.h.s8.bf16 %v866
        %v1155 = vunpack.c.h.s8.bf16 %v867
        %v1156 = vunpack.c.h.s8.bf16 %v868
        %v1157 = vunpack.c.h.s8.bf16 %v869
        %v1158 = vunpack.c.h.s8.bf16 %v870
        %v1159 = vunpack.c.h.s8.bf16 %v871
        %v1160 = vunpack.c.h.s8.bf16 %v872
        %v1161 = vunpack.c.h.s8.bf16 %v873
        %v1162 = vunpack.c.h.s8.bf16 %v874
        %v1163 = vunpack.c.h.s8.bf16 %v875
        %v1164 = vunpack.c.h.s8.bf16 %v876
        %v1165 = vunpack.c.h.s8.bf16 %v877
        %v1166 = vunpack.c.h.s8.bf16 %v878
        %v1167 = vunpack.c.h.s8.bf16 %v879
        %v1168 = vunpack.c.h.s8.bf16 %v880
        %v1169 = vunpack.c.h.s8.bf16 %v881
        %v1170 = vunpack.c.h.s8.bf16 %v882
        %v1171 = vunpack.c.h.s8.bf16 %v883
        %v1172 = vunpack.c.h.s8.bf16 %v884
        %v1173 = vunpack.c.h.s8.bf16 %v885
        %v1174 = vunpack.c.h.s8.bf16 %v886
        %v1175 = vunpack.c.l.s8.bf16 %v887
        %v1176 = vunpack.c.l.s8.bf16 %v888
        %v1177 = vunpack.c.l.s8.bf16 %v889
        %v1178 = vunpack.c.l.s8.bf16 %v890
        %v1179 = vunpack.c.l.s8.bf16 %v891
        %v1180 = vunpack.c.l.s8.bf16 %v892
        %v1181 = vunpack.c.l.s8.bf16 %v893
        %v1182 = vunpack.c.l.s8.bf16 %v894
        %v1183 = vunpack.c.l.s8.bf16 %v895
        %v1184 = vunpack.c.l.s8.bf16 %v896
        %v1185 = vunpack.c.l.s8.bf16 %v897
        %v1186 = vunpack.c.l.s8.bf16 %v898
        %v1187 = vunpack.c.l.s8.bf16 %v899
        %v1188 = vunpack.c.l.s8.bf16 %v900
        %v1189 = vunpack.c.l.s8.bf16 %v901
        %v1190 = vunpack.c.l.s8.bf16 %v902
        %v1191 = vunpack.c.l.s8.bf16 %v903
        %v1192 = vunpack.c.l.s8.bf16 %v904
        %v1193 = vunpack.c.l.s8.bf16 %v905
        %v1194 = vunpack.c.l.s8.bf16 %v906
        %v1195 = vunpack.c.l.s8.bf16 %v907
        %v1196 = vunpack.c.l.s8.bf16 %v908
        %v1197 = vunpack.c.l.s8.bf16 %v909
        %v1198 = vunpack.c.l.s8.bf16 %v910
        %v1199 = vunpack.c.h.s8.bf16 %v887
        %v1200 = vunpack.c.h.s8.bf16 %v888
        %v1201 = vunpack.c.h.s8.bf16 %v889
        %v1202 = vunpack.c.h.s8.bf16 %v890
        %v1203 = vunpack.c.h.s8.bf16 %v891
        %v1204 = vunpack.c.h.s8.bf16 %v892
        %v1205 = vunpack.c.h.s8.bf16 %v893
        %v1206 = vunpack.c.h.s8.bf16 %v894
        %v1207 = vunpack.c.h.s8.bf16 %v895
        %v1208 = vunpack.c.h.s8.bf16 %v896
        %v1209 = vunpack.c.h.s8.bf16 %v897
        %v1210 = vunpack.c.h.s8.bf16 %v898
        %v1211 = vunpack.c.h.s8.bf16 %v899
        %v1212 = vunpack.c.h.s8.bf16 %v900
        %v1213 = vunpack.c.h.s8.bf16 %v901
        %v1214 = vunpack.c.h.s8.bf16 %v902
        %v1215 = vunpack.c.h.s8.bf16 %v903
        %v1216 = vunpack.c.h.s8.bf16 %v904
        %v1217 = vunpack.c.h.s8.bf16 %v905
        %v1218 = vunpack.c.h.s8.bf16 %v906
        %v1219 = vunpack.c.h.s8.bf16 %v907
        %v1220 = vunpack.c.h.s8.bf16 %v908
        %v1221 = vunpack.c.h.s8.bf16 %v909
        %v1222 = vunpack.c.h.s8.bf16 %v910
        %v1223 = vunpack.c.l.s8.bf16 %v911
        %v1224 = vunpack.c.l.s8.bf16 %v912
        %v1225 = vunpack.c.l.s8.bf16 %v913
        %v1226 = vunpack.c.l.s8.bf16 %v914
        %v1227 = vunpack.c.l.s8.bf16 %v915
        %v1228 = vunpack.c.l.s8.bf16 %v916
        %v1229 = vunpack.c.l.s8.bf16 %v917
        %v1230 = vunpack.c.l.s8.bf16 %v918
        %v1231 = vunpack.c.l.s8.bf16 %v919
        %v1232 = vunpack.c.l.s8.bf16 %v920
        %v1233 = vunpack.c.l.s8.bf16 %v921
        %v1234 = vunpack.c.l.s8.bf16 %v922
        %v1235 = vunpack.c.l.s8.bf16 %v923
        %v1236 = vunpack.c.l.s8.bf16 %v924
        %v1237 = vunpack.c.l.s8.bf16 %v925
        %v1238 = vunpack.c.l.s8.bf16 %v926
        %v1239 = vunpack.c.l.s8.bf16 %v927
        %v1240 = vunpack.c.l.s8.bf16 %v928
        %v1241 = vunpack.c.l.s8.bf16 %v929
        %v1242 = vunpack.c.l.s8.bf16 %v930
        %v1243 = vunpack.c.l.s8.bf16 %v931
        %v1244 = vunpack.c.l.s8.bf16 %v932
        %v1245 = vunpack.c.l.s8.bf16 %v933
        %v1246 = vunpack.c.l.s8.bf16 %v934
        %v1247 = vunpack.c.h.s8.bf16 %v911
        %v1248 = vunpack.c.h.s8.bf16 %v912
        %v1249 = vunpack.c.h.s8.bf16 %v913
        %v1250 = vunpack.c.h.s8.bf16 %v914
        %v1251 = vunpack.c.h.s8.bf16 %v915
        %v1252 = vunpack.c.h.s8.bf16 %v916
        %v1253 = vunpack.c.h.s8.bf16 %v917
        %v1254 = vunpack.c.h.s8.bf16 %v918
        %v1255 = vunpack.c.h.s8.bf16 %v919
        %v1256 = vunpack.c.h.s8.bf16 %v920
        %v1257 = vunpack.c.h.s8.bf16 %v921
        %v1258 = vunpack.c.h.s8.bf16 %v922
        %v1259 = vunpack.c.h.s8.bf16 %v923
        %v1260 = vunpack.c.h.s8.bf16 %v924
        %v1261 = vunpack.c.h.s8.bf16 %v925
        %v1262 = vunpack.c.h.s8.bf16 %v926
        %v1263 = vunpack.c.h.s8.bf16 %v927
        %v1264 = vunpack.c.h.s8.bf16 %v928
        %v1265 = vunpack.c.h.s8.bf16 %v929
        %v1266 = vunpack.c.h.s8.bf16 %v930
        %v1267 = vunpack.c.h.s8.bf16 %v931
        %v1268 = vunpack.c.h.s8.bf16 %v932
        %v1269 = vunpack.c.h.s8.bf16 %v933
        %v1270 = vunpack.c.h.s8.bf16 %v934
        %v1271 = vunpack.c.l.s8.bf16 %v935
        %v1272 = vunpack.c.l.s8.bf16 %v936
        %v1273 = vunpack.c.l.s8.bf16 %v937
        %v1274 = vunpack.c.l.s8.bf16 %v938
        %v1275 = vunpack.c.l.s8.bf16 %v939
        %v1276 = vunpack.c.l.s8.bf16 %v940
        %v1277 = vunpack.c.l.s8.bf16 %v941
        %v1278 = vunpack.c.l.s8.bf16 %v942
        %v1279 = vunpack.c.l.s8.bf16 %v943
        %v1280 = vunpack.c.l.s8.bf16 %v944
        %v1281 = vunpack.c.l.s8.bf16 %v945
        %v1282 = vunpack.c.l.s8.bf16 %v946
        %v1283 = vunpack.c.l.s8.bf16 %v947
        %v1284 = vunpack.c.l.s8.bf16 %v948
        %v1285 = vunpack.c.l.s8.bf16 %v949
        %v1286 = vunpack.c.l.s8.bf16 %v950
        %v1287 = vunpack.c.l.s8.bf16 %v951
        %v1288 = vunpack.c.l.s8.bf16 %v952
        %v1289 = vunpack.c.l.s8.bf16 %v953
        %v1290 = vunpack.c.l.s8.bf16 %v954
        %v1291 = vunpack.c.l.s8.bf16 %v955
        %v1292 = vunpack.c.l.s8.bf16 %v956
        %v1293 = vunpack.c.l.s8.bf16 %v957
        %v1294 = vunpack.c.l.s8.bf16 %v958
        %v1295 = vunpack.c.h.s8.bf16 %v935
        %v1296 = vunpack.c.h.s8.bf16 %v936
        %v1297 = vunpack.c.h.s8.bf16 %v937
        %v1298 = vunpack.c.h.s8.bf16 %v938
        %v1299 = vunpack.c.h.s8.bf16 %v939
        %v1300 = vunpack.c.h.s8.bf16 %v940
        %v1301 = vunpack.c.h.s8.bf16 %v941
        %v1302 = vunpack.c.h.s8.bf16 %v942
        %v1303 = vunpack.c.h.s8.bf16 %v943
        %v1304 = vunpack.c.h.s8.bf16 %v944
        %v1305 = vunpack.c.h.s8.bf16 %v945
        %v1306 = vunpack.c.h.s8.bf16 %v946
        %v1307 = vunpack.c.h.s8.bf16 %v947
        %v1308 = vunpack.c.h.s8.bf16 %v948
        %v1309 = vunpack.c.h.s8.bf16 %v949
        %v1310 = vunpack.c.h.s8.bf16 %v950
        %v1311 = vunpack.c.h.s8.bf16 %v951
        %v1312 = vunpack.c.h.s8.bf16 %v952
        %v1313 = vunpack.c.h.s8.bf16 %v953
        %v1314 = vunpack.c.h.s8.bf16 %v954
        %v1315 = vunpack.c.h.s8.bf16 %v955
        %v1316 = vunpack.c.h.s8.bf16 %v956
        %v1317 = vunpack.c.h.s8.bf16 %v957
        %v1318 = vunpack.c.h.s8.bf16 %v958
        %v1319 = vunpack.c.l.s8.bf16 %v959
        %v1320 = vunpack.c.l.s8.bf16 %v960
        %v1321 = vunpack.c.l.s8.bf16 %v961
        %v1322 = vunpack.c.l.s8.bf16 %v962
        %v1323 = vunpack.c.l.s8.bf16 %v963
        %v1324 = vunpack.c.l.s8.bf16 %v964
        %v1325 = vunpack.c.l.s8.bf16 %v965
        %v1326 = vunpack.c.l.s8.bf16 %v966
        %v1327 = vunpack.c.l.s8.bf16 %v967
        %v1328 = vunpack.c.l.s8.bf16 %v968
        %v1329 = vunpack.c.l.s8.bf16 %v969
        %v1330 = vunpack.c.l.s8.bf16 %v970
        %v1331 = vunpack.c.l.s8.bf16 %v971
        %v1332 = vunpack.c.l.s8.bf16 %v972
        %v1333 = vunpack.c.l.s8.bf16 %v973
        %v1334 = vunpack.c.l.s8.bf16 %v974
        %v1335 = vunpack.c.l.s8.bf16 %v975
        %v1336 = vunpack.c.l.s8.bf16 %v976
        %v1337 = vunpack.c.l.s8.bf16 %v977
        %v1338 = vunpack.c.l.s8.bf16 %v978
        %v1339 = vunpack.c.l.s8.bf16 %v979
        %v1340 = vunpack.c.l.s8.bf16 %v980
        %v1341 = vunpack.c.l.s8.bf16 %v981
        %v1342 = vunpack.c.l.s8.bf16 %v982
        %v1343 = vunpack.c.h.s8.bf16 %v959
        %v1344 = vunpack.c.h.s8.bf16 %v960
        %v1345 = vunpack.c.h.s8.bf16 %v961
        %v1346 = vunpack.c.h.s8.bf16 %v962
        %v1347 = vunpack.c.h.s8.bf16 %v963
        %v1348 = vunpack.c.h.s8.bf16 %v964
        %v1349 = vunpack.c.h.s8.bf16 %v965
        %v1350 = vunpack.c.h.s8.bf16 %v966
        %v1351 = vunpack.c.h.s8.bf16 %v967
        %v1352 = vunpack.c.h.s8.bf16 %v968
        %v1353 = vunpack.c.h.s8.bf16 %v969
        %v1354 = vunpack.c.h.s8.bf16 %v970
        %v1355 = vunpack.c.h.s8.bf16 %v971
        %v1356 = vunpack.c.h.s8.bf16 %v972
        %v1357 = vunpack.c.h.s8.bf16 %v973
        %v1358 = vunpack.c.h.s8.bf16 %v974
        %v1359 = vunpack.c.h.s8.bf16 %v975
        %v1360 = vunpack.c.h.s8.bf16 %v976
        %v1361 = vunpack.c.h.s8.bf16 %v977
        %v1362 = vunpack.c.h.s8.bf16 %v978
        %v1363 = vunpack.c.h.s8.bf16 %v979
        %v1364 = vunpack.c.h.s8.bf16 %v980
        %v1365 = vunpack.c.h.s8.bf16 %v981
        %v1366 = vunpack.c.h.s8.bf16 %v982
        %v1367 = vpack.c.bf16 %v789, %v789
        %v1368 = vpack.c.bf16 %v790, %v790
        %1369 = vmatprep.subr.bf16.mxu0 %v984
        %1370 = vmatpush1.bf16.msra.mxu0 %v983
        %1371 = vmatprep.subr.bf16.mxu0 %v1008
        %1372 = vmatpush1.bf16.msra.mxu0 %v1007
        %1373 = vmatprep.subr.bf16.mxu0 %v1032
        %1374 = vmatpush1.bf16.msra.mxu0 %v1031
        %1375 = vmatprep.subr.bf16.mxu0 %v1056
        %1376 = vmatpush1.bf16.msra.mxu0 %v1055
        %1377 = vmatprep.subr.bf16.mxu0 %v1080
        %1378 = vmatpush1.bf16.msra.mxu0 %v1079
        %1379 = vmatprep.subr.bf16.mxu0 %v1104
        %1380 = vmatpush1.bf16.msra.mxu0 %v1103
        %1381 = vmatprep.subr.bf16.mxu0 %v1128
        %1382 = vmatpush1.bf16.msra.mxu0 %v1127
        %1383 = vmatprep.subr.bf16.mxu0 %v1152
        %1384 = vmatpush1.bf16.msra.mxu0 %v1151
        %1385 = vmatprep.subr.bf16.mxu0 %v1176
        %1386 = vmatpush1.bf16.msra.mxu0 %v1175
        %1387 = vmatprep.subr.bf16.mxu0 %v1200
        %1388 = vmatpush1.bf16.msra.mxu0 %v1199
        %1389 = vmatprep.subr.bf16.mxu0 %v1224
        %1390 = vmatpush1.bf16.msra.mxu0 %v1223
        %1391 = vmatprep.subr.bf16.mxu0 %v1248
        %1392 = vmatpush1.bf16.msra.mxu0 %v1247
        %1393 = vmatprep.subr.bf16.mxu0 %v1272
        %1394 = vmatpush1.bf16.msra.mxu0 %v1271
        %1395 = vmatprep.subr.bf16.mxu0 %v1296
        %1396 = vmatpush1.bf16.msra.mxu0 %v1295
        %1397 = vmatprep.subr.bf16.mxu0 %v1320
        %1398 = vmatpush1.bf16.msra.mxu0 %v1319
        %1399 = vmatprep.subr.bf16.mxu0 %v1344
        %1400 = vmatpush1.bf16.msra.mxu0 %v1343
        %1401 = vmatprep.mubr.bf16.mxu0 %v1368
        %1402 = vmatmul.mubr.bf16.gmra.mrb[0].mxu0 %v1367
        %v1403 = vpop.f32.mrb[0].mxu0
        %v1404 = vadd.f32 0.0, %v1403
        %v1405 = vpop.f32.mrb[0].mxu0
        %v1406 = vadd.f32 0.0, %v1405
        %v1407 = vpop.f32.mrb[0].mxu0
        %v1408 = vpop.f32.mrb[0].mxu0
        %1409 = vdwg.mxu0
        %1410 = vmatprep.subr.bf16.mxu0 %v986
        %1411 = vmatpush1.bf16.msra.mxu0 %v985
        %1412 = vmatprep.subr.bf16.mxu0 %v1010
        %1413 = vmatpush1.bf16.msra.mxu0 %v1009
        %1414 = vmatprep.subr.bf16.mxu0 %v1034
        %1415 = vmatpush1.bf16.msra.mxu0 %v1033
        %1416 = vmatprep.subr.bf16.mxu0 %v1058
        %1417 = vmatpush1.bf16.msra.mxu0 %v1057
        %1418 = vmatprep.subr.bf16.mxu0 %v1082
        %1419 = vmatpush1.bf16.msra.mxu0 %v1081
        %1420 = vmatprep.subr.bf16.mxu0 %v1106
        %1421 = vmatpush1.bf16.msra.mxu0 %v1105
        %1422 = vmatprep.subr.bf16.mxu0 %v1130
        %1423 = vmatpush1.bf16.msra.mxu0 %v1129
        %1424 = vmatprep.subr.bf16.mxu0 %v1154
        %1425 = vmatpush1.bf16.msra.mxu0 %v1153
        %1426 = vmatprep.subr.bf16.mxu0 %v1178
        %1427 = vmatpush1.bf16.msra.mxu0 %v1177
        %1428 = vmatprep.subr.bf16.mxu0 %v1202
        %1429 = vmatpush1.bf16.msra.mxu0 %v1201
        %1430 = vmatprep.subr.bf16.mxu0 %v1226
        %1431 = vmatpush1.bf16.msra.mxu0 %v1225
        %1432 = vmatprep.subr.bf16.mxu0 %v1250
        %1433 = vmatpush1.bf16.msra.mxu0 %v1249
        %1434 = vmatprep.subr.bf16.mxu0 %v1274
        %1435 = vmatpush1.bf16.msra.mxu0 %v1273
        %1436 = vmatprep.subr.bf16.mxu0 %v1298
        %1437 = vmatpush1.bf16.msra.mxu0 %v1297
        %1438 = vmatprep.subr.bf16.mxu0 %v1322
        %1439 = vmatpush1.bf16.msra.mxu0 %v1321
        %1440 = vmatprep.subr.bf16.mxu0 %v1346
        %1441 = vmatpush1.bf16.msra.mxu0 %v1345
        %1442 = vmatprep.mubr.bf16.mxu0 %v1368
        %1443 = vmatmul.mubr.bf16.gmra.mrb[0].mxu0 %v1367
        %v1444 = vpop.f32.mrb[0].mxu0
        %v1445 = vadd.f32 0.0, %v1444
        %v1446 = vpop.f32.mrb[0].mxu0
        %v1447 = vadd.f32 0.0, %v1446
        %v1448 = vpop.f32.mrb[0].mxu0
        %v1449 = vpop.f32.mrb[0].mxu0
        %1450 = vdwg.mxu0
        %1451 = vmatprep.subr.bf16.mxu0 %v988
        %1452 = vmatpush1.bf16.msra.mxu0 %v987
        %1453 = vmatprep.subr.bf16.mxu0 %v1012
        %1454 = vmatpush1.bf16.msra.mxu0 %v1011
        %1455 = vmatprep.subr.bf16.mxu0 %v1036
        %1456 = vmatpush1.bf16.msra.mxu0 %v1035
        %1457 = vmatprep.subr.bf16.mxu0 %v1060
        %1458 = vmatpush1.bf16.msra.mxu0 %v1059
        %1459 = vmatprep.subr.bf16.mxu0 %v1084
        %1460 = vmatpush1.bf16.msra.mxu0 %v1083
        %1461 = vmatprep.subr.bf16.mxu0 %v1108
        %1462 = vmatpush1.bf16.msra.mxu0 %v1107
        %1463 = vmatprep.subr.bf16.mxu0 %v1132
        %1464 = vmatpush1.bf16.msra.mxu0 %v1131
        %1465 = vmatprep.subr.bf16.mxu0 %v1156
        %1466 = vmatpush1.bf16.msra.mxu0 %v1155
        %1467 = vmatprep.subr.bf16.mxu0 %v1180
        %1468 = vmatpush1.bf16.msra.mxu0 %v1179
        %1469 = vmatprep.subr.bf16.mxu0 %v1204
        %1470 = vmatpush1.bf16.msra.mxu0 %v1203
        %1471 = vmatprep.subr.bf16.mxu0 %v1228
        %1472 = vmatpush1.bf16.msra.mxu0 %v1227
        %1473 = vmatprep.subr.bf16.mxu0 %v1252
        %1474 = vmatpush1.bf16.msra.mxu0 %v1251
        %1475 = vmatprep.subr.bf16.mxu0 %v1276
        %1476 = vmatpush1.bf16.msra.mxu0 %v1275
        %1477 = vmatprep.subr.bf16.mxu0 %v1300
        %1478 = vmatpush1.bf16.msra.mxu0 %v1299
        %1479 = vmatprep.subr.bf16.mxu0 %v1324
        %1480 = vmatpush1.bf16.msra.mxu0 %v1323
        %1481 = vmatprep.subr.bf16.mxu0 %v1348
        %1482 = vmatpush1.bf16.msra.mxu0 %v1347
        %1483 = vmatprep.mubr.bf16.mxu0 %v1368
        %1484 = vmatmul.mubr.bf16.gmra.mrb[0].mxu0 %v1367
        %v1485 = vpop.f32.mrb[0].mxu0
        %v1486 = vadd.f32 0.0, %v1485
        %v1487 = vpop.f32.mrb[0].mxu0
        %v1488 = vadd.f32 0.0, %v1487
        %v1489 = vpop.f32.mrb[0].mxu0
        %v1490 = vpop.f32.mrb[0].mxu0
        %1491 = vdwg.mxu0
        %1492 = vmatprep.subr.bf16.mxu0 %v990
        %1493 = vmatpush1.bf16.msra.mxu0 %v989
        %1494 = vmatprep.subr.bf16.mxu0 %v1014
        %1495 = vmatpush1.bf16.msra.mxu0 %v1013
        %1496 = vmatprep.subr.bf16.mxu0 %v1038
        %1497 = vmatpush1.bf16.msra.mxu0 %v1037
        %1498 = vmatprep.subr.bf16.mxu0 %v1062
        %1499 = vmatpush1.bf16.msra.mxu0 %v1061
        %1500 = vmatprep.subr.bf16.mxu0 %v1086
        %1501 = vmatpush1.bf16.msra.mxu0 %v1085
        %1502 = vmatprep.subr.bf16.mxu0 %v1110
        %1503 = vmatpush1.bf16.msra.mxu0 %v1109
        %1504 = vmatprep.subr.bf16.mxu0 %v1134
        %1505 = vmatpush1.bf16.msra.mxu0 %v1133
        %1506 = vmatprep.subr.bf16.mxu0 %v1158
        %1507 = vmatpush1.bf16.msra.mxu0 %v1157
        %1508 = vmatprep.subr.bf16.mxu0 %v1182
        %1509 = vmatpush1.bf16.msra.mxu0 %v1181
        %1510 = vmatprep.subr.bf16.mxu0 %v1206
        %1511 = vmatpush1.bf16.msra.mxu0 %v1205
        %1512 = vmatprep.subr.bf16.mxu0 %v1230
        %1513 = vmatpush1.bf16.msra.mxu0 %v1229
        %1514 = vmatprep.subr.bf16.mxu0 %v1254
        %1515 = vmatpush1.bf16.msra.mxu0 %v1253
        %1516 = vmatprep.subr.bf16.mxu0 %v1278
        %1517 = vmatpush1.bf16.msra.mxu0 %v1277
        %1518 = vmatprep.subr.bf16.mxu0 %v1302
        %1519 = vmatpush1.bf16.msra.mxu0 %v1301
        %1520 = vmatprep.subr.bf16.mxu0 %v1326
        %1521 = vmatpush1.bf16.msra.mxu0 %v1325
        %1522 = vmatprep.subr.bf16.mxu0 %v1350
        %1523 = vmatpush1.bf16.msra.mxu0 %v1349
        %1524 = vmatprep.mubr.bf16.mxu0 %v1368
        %1525 = vmatmul.mubr.bf16.gmra.mrb[0].mxu0 %v1367
        %v1526 = vpop.f32.mrb[0].mxu0
        %v1527 = vadd.f32 0.0, %v1526
        %v1528 = vpop.f32.mrb[0].mxu0
        %v1529 = vadd.f32 0.0, %v1528
        %v1530 = vpop.f32.mrb[0].mxu0
        %v1531 = vpop.f32.mrb[0].mxu0
        %1532 = vdwg.mxu0
        %1533 = vmatprep.subr.bf16.mxu0 %v992
        %1534 = vmatpush1.bf16.msra.mxu0 %v991
        %1535 = vmatprep.subr.bf16.mxu0 %v1016
        %1536 = vmatpush1.bf16.msra.mxu0 %v1015
        %1537 = vmatprep.subr.bf16.mxu0 %v1040
        %1538 = vmatpush1.bf16.msra.mxu0 %v1039
        %1539 = vmatprep.subr.bf16.mxu0 %v1064
        %1540 = vmatpush1.bf16.msra.mxu0 %v1063
        %1541 = vmatprep.subr.bf16.mxu0 %v1088
        %1542 = vmatpush1.bf16.msra.mxu0 %v1087
        %1543 = vmatprep.subr.bf16.mxu0 %v1112
        %1544 = vmatpush1.bf16.msra.mxu0 %v1111
        %1545 = vmatprep.subr.bf16.mxu0 %v1136
        %1546 = vmatpush1.bf16.msra.mxu0 %v1135
        %1547 = vmatprep.subr.bf16.mxu0 %v1160
        %1548 = vmatpush1.bf16.msra.mxu0 %v1159
        %1549 = vmatprep.subr.bf16.mxu0 %v1184
        %1550 = vmatpush1.bf16.msra.mxu0 %v1183
        %1551 = vmatprep.subr.bf16.mxu0 %v1208
        %1552 = vmatpush1.bf16.msra.mxu0 %v1207
        %1553 = vmatprep.subr.bf16.mxu0 %v1232
        %1554 = vmatpush1.bf16.msra.mxu0 %v1231
        %1555 = vmatprep.subr.bf16.mxu0 %v1256
        %1556 = vmatpush1.bf16.msra.mxu0 %v1255
        %1557 = vmatprep.subr.bf16.mxu0 %v1280
        %1558 = vmatpush1.bf16.msra.mxu0 %v1279
        %1559 = vmatprep.subr.bf16.mxu0 %v1304
        %1560 = vmatpush1.bf16.msra.mxu0 %v1303
        %1561 = vmatprep.subr.bf16.mxu0 %v1328
        %1562 = vmatpush1.bf16.msra.mxu0 %v1327
        %1563 = vmatprep.subr.bf16.mxu0 %v1352
        %1564 = vmatpush1.bf16.msra.mxu0 %v1351
        %1565 = vmatprep.mubr.bf16.mxu0 %v1368
        %1566 = vmatmul.mubr.bf16.gmra.mrb[0].mxu0 %v1367
        %v1567 = vpop.f32.mrb[0].mxu0
        %v1568 = vadd.f32 0.0, %v1567
        %v1569 = vpop.f32.mrb[0].mxu0
        %v1570 = vadd.f32 0.0, %v1569
        %v1571 = vpop.f32.mrb[0].mxu0
        %v1572 = vpop.f32.mrb[0].mxu0
        %1573 = vdwg.mxu0
        %1574 = vmatprep.subr.bf16.mxu0 %v994
        %1575 = vmatpush1.bf16.msra.mxu0 %v993
        %1576 = vmatprep.subr.bf16.mxu0 %v1018
        %1577 = vmatpush1.bf16.msra.mxu0 %v1017
        %1578 = vmatprep.subr.bf16.mxu0 %v1042
        %1579 = vmatpush1.bf16.msra.mxu0 %v1041
        %1580 = vmatprep.subr.bf16.mxu0 %v1066
        %1581 = vmatpush1.bf16.msra.mxu0 %v1065
        %1582 = vmatprep.subr.bf16.mxu0 %v1090
        %1583 = vmatpush1.bf16.msra.mxu0 %v1089
        %1584 = vmatprep.subr.bf16.mxu0 %v1114
        %1585 = vmatpush1.bf16.msra.mxu0 %v1113
        %1586 = vmatprep.subr.bf16.mxu0 %v1138
        %1587 = vmatpush1.bf16.msra.mxu0 %v1137
        %1588 = vmatprep.subr.bf16.mxu0 %v1162
        %1589 = vmatpush1.bf16.msra.mxu0 %v1161
        %1590 = vmatprep.subr.bf16.mxu0 %v1186
        %1591 = vmatpush1.bf16.msra.mxu0 %v1185
        %1592 = vmatprep.subr.bf16.mxu0 %v1210
        %1593 = vmatpush1.bf16.msra.mxu0 %v1209
        %1594 = vmatprep.subr.bf16.mxu0 %v1234
        %1595 = vmatpush1.bf16.msra.mxu0 %v1233
        %1596 = vmatprep.subr.bf16.mxu0 %v1258
        %1597 = vmatpush1.bf16.msra.mxu0 %v1257
        %1598 = vmatprep.subr.bf16.mxu0 %v1282
        %1599 = vmatpush1.bf16.msra.mxu0 %v1281
        %1600 = vmatprep.subr.bf16.mxu0 %v1306
        %1601 = vmatpush1.bf16.msra.mxu0 %v1305
        %1602 = vmatprep.subr.bf16.mxu0 %v1330
        %1603 = vmatpush1.bf16.msra.mxu0 %v1329
        %1604 = vmatprep.subr.bf16.mxu0 %v1354
        %1605 = vmatpush1.bf16.msra.mxu0 %v1353
        %1606 = vmatprep.mubr.bf16.mxu0 %v1368
        %1607 = vmatmul.mubr.bf16.gmra.mrb[0].mxu0 %v1367
        %v1608 = vpop.f32.mrb[0].mxu0
        %v1609 = vadd.f32 0.0, %v1608
        %v1610 = vpop.f32.mrb[0].mxu0
        %v1611 = vadd.f32 0.0, %v1610
        %v1612 = vpop.f32.mrb[0].mxu0
        %v1613 = vpop.f32.mrb[0].mxu0
        %1614 = vdwg.mxu0
        %1615 = vmatprep.subr.bf16.mxu0 %v996
        %1616 = vmatpush1.bf16.msra.mxu0 %v995
        %1617 = vmatprep.subr.bf16.mxu0 %v1020
        %1618 = vmatpush1.bf16.msra.mxu0 %v1019
        %1619 = vmatprep.subr.bf16.mxu0 %v1044
        %1620 = vmatpush1.bf16.msra.mxu0 %v1043
        %1621 = vmatprep.subr.bf16.mxu0 %v1068
        %1622 = vmatpush1.bf16.msra.mxu0 %v1067
        %1623 = vmatprep.subr.bf16.mxu0 %v1092
        %1624 = vmatpush1.bf16.msra.mxu0 %v1091
        %1625 = vmatprep.subr.bf16.mxu0 %v1116
        %1626 = vmatpush1.bf16.msra.mxu0 %v1115
        %1627 = vmatprep.subr.bf16.mxu0 %v1140
        %1628 = vmatpush1.bf16.msra.mxu0 %v1139
        %1629 = vmatprep.subr.bf16.mxu0 %v1164
        %1630 = vmatpush1.bf16.msra.mxu0 %v1163
        %1631 = vmatprep.subr.bf16.mxu0 %v1188
        %1632 = vmatpush1.bf16.msra.mxu0 %v1187
        %1633 = vmatprep.subr.bf16.mxu0 %v1212
        %1634 = vmatpush1.bf16.msra.mxu0 %v1211
        %1635 = vmatprep.subr.bf16.mxu0 %v1236
        %1636 = vmatpush1.bf16.msra.mxu0 %v1235
        %1637 = vmatprep.subr.bf16.mxu0 %v1260
        %1638 = vmatpush1.bf16.msra.mxu0 %v1259
        %1639 = vmatprep.subr.bf16.mxu0 %v1284
        %1640 = vmatpush1.bf16.msra.mxu0 %v1283
        %1641 = vmatprep.subr.bf16.mxu0 %v1308
        %1642 = vmatpush1.bf16.msra.mxu0 %v1307
        %1643 = vmatprep.subr.bf16.mxu0 %v1332
        %1644 = vmatpush1.bf16.msra.mxu0 %v1331
        %1645 = vmatprep.subr.bf16.mxu0 %v1356
        %1646 = vmatpush1.bf16.msra.mxu0 %v1355
        %1647 = vmatprep.mubr.bf16.mxu0 %v1368
        %1648 = vmatmul.mubr.bf16.gmra.mrb[0].mxu0 %v1367
        %v1649 = vpop.f32.mrb[0].mxu0
        %v1650 = vadd.f32 0.0, %v1649
        %v1651 = vpop.f32.mrb[0].mxu0
        %v1652 = vadd.f32 0.0, %v1651
        %v1653 = vpop.f32.mrb[0].mxu0
        %v1654 = vpop.f32.mrb[0].mxu0
        %1655 = vdwg.mxu0
        %1656 = vmatprep.subr.bf16.mxu0 %v998
        %1657 = vmatpush1.bf16.msra.mxu0 %v997
        %1658 = vmatprep.subr.bf16.mxu0 %v1022
        %1659 = vmatpush1.bf16.msra.mxu0 %v1021
        %1660 = vmatprep.subr.bf16.mxu0 %v1046
        %1661 = vmatpush1.bf16.msra.mxu0 %v1045
        %1662 = vmatprep.subr.bf16.mxu0 %v1070
        %1663 = vmatpush1.bf16.msra.mxu0 %v1069
        %1664 = vmatprep.subr.bf16.mxu0 %v1094
        %1665 = vmatpush1.bf16.msra.mxu0 %v1093
        %1666 = vmatprep.subr.bf16.mxu0 %v1118
        %1667 = vmatpush1.bf16.msra.mxu0 %v1117
        %1668 = vmatprep.subr.bf16.mxu0 %v1142
        %1669 = vmatpush1.bf16.msra.mxu0 %v1141
        %1670 = vmatprep.subr.bf16.mxu0 %v1166
        %1671 = vmatpush1.bf16.msra.mxu0 %v1165
        %1672 = vmatprep.subr.bf16.mxu0 %v1190
        %1673 = vmatpush1.bf16.msra.mxu0 %v1189
        %1674 = vmatprep.subr.bf16.mxu0 %v1214
        %1675 = vmatpush1.bf16.msra.mxu0 %v1213
        %1676 = vmatprep.subr.bf16.mxu0 %v1238
        %1677 = vmatpush1.bf16.msra.mxu0 %v1237
        %1678 = vmatprep.subr.bf16.mxu0 %v1262
        %1679 = vmatpush1.bf16.msra.mxu0 %v1261
        %1680 = vmatprep.subr.bf16.mxu0 %v1286
        %1681 = vmatpush1.bf16.msra.mxu0 %v1285
        %1682 = vmatprep.subr.bf16.mxu0 %v1310
        %1683 = vmatpush1.bf16.msra.mxu0 %v1309
        %1684 = vmatprep.subr.bf16.mxu0 %v1334
        %1685 = vmatpush1.bf16.msra.mxu0 %v1333
        %1686 = vmatprep.subr.bf16.mxu0 %v1358
        %1687 = vmatpush1.bf16.msra.mxu0 %v1357
        %1688 = vmatprep.mubr.bf16.mxu0 %v1368
        %1689 = vmatmul.mubr.bf16.gmra.mrb[0].mxu0 %v1367
        %v1690 = vpop.f32.mrb[0].mxu0
        %v1691 = vadd.f32 0.0, %v1690
        %v1692 = vpop.f32.mrb[0].mxu0
        %v1693 = vadd.f32 0.0, %v1692
        %v1694 = vpop.f32.mrb[0].mxu0
        %v1695 = vpop.f32.mrb[0].mxu0
        %1696 = vdwg.mxu0
        %1697 = vmatprep.subr.bf16.mxu0 %v1000
        %1698 = vmatpush1.bf16.msra.mxu0 %v999
        %1699 = vmatprep.subr.bf16.mxu0 %v1024
        %1700 = vmatpush1.bf16.msra.mxu0 %v1023
        %1701 = vmatprep.subr.bf16.mxu0 %v1048
        %1702 = vmatpush1.bf16.msra.mxu0 %v1047
        %1703 = vmatprep.subr.bf16.mxu0 %v1072
        %1704 = vmatpush1.bf16.msra.mxu0 %v1071
        %1705 = vmatprep.subr.bf16.mxu0 %v1096
        %1706 = vmatpush1.bf16.msra.mxu0 %v1095
        %1707 = vmatprep.subr.bf16.mxu0 %v1120
        %1708 = vmatpush1.bf16.msra.mxu0 %v1119
        %1709 = vmatprep.subr.bf16.mxu0 %v1144
        %1710 = vmatpush1.bf16.msra.mxu0 %v1143
        %1711 = vmatprep.subr.bf16.mxu0 %v1168
        %1712 = vmatpush1.bf16.msra.mxu0 %v1167
        %1713 = vmatprep.subr.bf16.mxu0 %v1192
        %1714 = vmatpush1.bf16.msra.mxu0 %v1191
        %1715 = vmatprep.subr.bf16.mxu0 %v1216
        %1716 = vmatpush1.bf16.msra.mxu0 %v1215
        %1717 = vmatprep.subr.bf16.mxu0 %v1240
        %1718 = vmatpush1.bf16.msra.mxu0 %v1239
        %1719 = vmatprep.subr.bf16.mxu0 %v1264
        %1720 = vmatpush1.bf16.msra.mxu0 %v1263
        %1721 = vmatprep.subr.bf16.mxu0 %v1288
        %1722 = vmatpush1.bf16.msra.mxu0 %v1287
        %1723 = vmatprep.subr.bf16.mxu0 %v1312
        %1724 = vmatpush1.bf16.msra.mxu0 %v1311
        %1725 = vmatprep.subr.bf16.mxu0 %v1336
        %1726 = vmatpush1.bf16.msra.mxu0 %v1335
        %1727 = vmatprep.subr.bf16.mxu0 %v1360
        %1728 = vmatpush1.bf16.msra.mxu0 %v1359
        %1729 = vmatprep.mubr.bf16.mxu0 %v1368
        %1730 = vmatmul.mubr.bf16.gmra.mrb[0].mxu0 %v1367
        %v1731 = vpop.f32.mrb[0].mxu0
        %v1732 = vadd.f32 0.0, %v1731
        %v1733 = vpop.f32.mrb[0].mxu0
        %v1734 = vadd.f32 0.0, %v1733
        %v1735 = vpop.f32.mrb[0].mxu0
        %v1736 = vpop.f32.mrb[0].mxu0
        %1737 = vdwg.mxu0
        %1738 = vmatprep.subr.bf16.mxu0 %v1002
        %1739 = vmatpush1.bf16.msra.mxu0 %v1001
        %1740 = vmatprep.subr.bf16.mxu0 %v1026
        %1741 = vmatpush1.bf16.msra.mxu0 %v1025
        %1742 = vmatprep.subr.bf16.mxu0 %v1050
        %1743 = vmatpush1.bf16.msra.mxu0 %v1049
        %1744 = vmatprep.subr.bf16.mxu0 %v1074
        %1745 = vmatpush1.bf16.msra.mxu0 %v1073
        %1746 = vmatprep.subr.bf16.mxu0 %v1098
        %1747 = vmatpush1.bf16.msra.mxu0 %v1097
        %1748 = vmatprep.subr.bf16.mxu0 %v1122
        %1749 = vmatpush1.bf16.msra.mxu0 %v1121
        %1750 = vmatprep.subr.bf16.mxu0 %v1146
        %1751 = vmatpush1.bf16.msra.mxu0 %v1145
        %1752 = vmatprep.subr.bf16.mxu0 %v1170
        %1753 = vmatpush1.bf16.msra.mxu0 %v1169
        %1754 = vmatprep.subr.bf16.mxu0 %v1194
        %1755 = vmatpush1.bf16.msra.mxu0 %v1193
        %1756 = vmatprep.subr.bf16.mxu0 %v1218
        %1757 = vmatpush1.bf16.msra.mxu0 %v1217
        %1758 = vmatprep.subr.bf16.mxu0 %v1242
        %1759 = vmatpush1.bf16.msra.mxu0 %v1241
        %1760 = vmatprep.subr.bf16.mxu0 %v1266
        %1761 = vmatpush1.bf16.msra.mxu0 %v1265
        %1762 = vmatprep.subr.bf16.mxu0 %v1290
        %1763 = vmatpush1.bf16.msra.mxu0 %v1289
        %1764 = vmatprep.subr.bf16.mxu0 %v1314
        %1765 = vmatpush1.bf16.msra.mxu0 %v1313
        %1766 = vmatprep.subr.bf16.mxu0 %v1338
        %1767 = vmatpush1.bf16.msra.mxu0 %v1337
        %1768 = vmatprep.subr.bf16.mxu0 %v1362
        %1769 = vmatpush1.bf16.msra.mxu0 %v1361
        %1770 = vmatprep.mubr.bf16.mxu0 %v1368
        %1771 = vmatmul.mubr.bf16.gmra.mrb[0].mxu0 %v1367
        %v1772 = vpop.f32.mrb[0].mxu0
        %v1773 = vadd.f32 0.0, %v1772
        %v1774 = vpop.f32.mrb[0].mxu0
        %v1775 = vadd.f32 0.0, %v1774
        %v1776 = vpop.f32.mrb[0].mxu0
        %v1777 = vpop.f32.mrb[0].mxu0
        %1778 = vdwg.mxu0
        %1779 = vmatprep.subr.bf16.mxu0 %v1004
        %1780 = vmatpush1.bf16.msra.mxu0 %v1003
        %1781 = vmatprep.subr.bf16.mxu0 %v1028
        %1782 = vmatpush1.bf16.msra.mxu0 %v1027
        %1783 = vmatprep.subr.bf16.mxu0 %v1052
        %1784 = vmatpush1.bf16.msra.mxu0 %v1051
        %1785 = vmatprep.subr.bf16.mxu0 %v1076
        %1786 = vmatpush1.bf16.msra.mxu0 %v1075
        %1787 = vmatprep.subr.bf16.mxu0 %v1100
        %1788 = vmatpush1.bf16.msra.mxu0 %v1099
        %1789 = vmatprep.subr.bf16.mxu0 %v1124
        %1790 = vmatpush1.bf16.msra.mxu0 %v1123
        %1791 = vmatprep.subr.bf16.mxu0 %v1148
        %1792 = vmatpush1.bf16.msra.mxu0 %v1147
        %1793 = vmatprep.subr.bf16.mxu0 %v1172
        %1794 = vmatpush1.bf16.msra.mxu0 %v1171
        %1795 = vmatprep.subr.bf16.mxu0 %v1196
        %1796 = vmatpush1.bf16.msra.mxu0 %v1195
        %1797 = vmatprep.subr.bf16.mxu0 %v1220
        %1798 = vmatpush1.bf16.msra.mxu0 %v1219
        %1799 = vmatprep.subr.bf16.mxu0 %v1244
        %1800 = vmatpush1.bf16.msra.mxu0 %v1243
        %1801 = vmatprep.subr.bf16.mxu0 %v1268
        %1802 = vmatpush1.bf16.msra.mxu0 %v1267
        %1803 = vmatprep.subr.bf16.mxu0 %v1292
        %1804 = vmatpush1.bf16.msra.mxu0 %v1291
        %1805 = vmatprep.subr.bf16.mxu0 %v1316
        %1806 = vmatpush1.bf16.msra.mxu0 %v1315
        %1807 = vmatprep.subr.bf16.mxu0 %v1340
        %1808 = vmatpush1.bf16.msra.mxu0 %v1339
        %1809 = vmatprep.subr.bf16.mxu0 %v1364
        %1810 = vmatpush1.bf16.msra.mxu0 %v1363
        %1811 = vmatprep.mubr.bf16.mxu0 %v1368
        %1812 = vmatmul.mubr.bf16.gmra.mrb[0].mxu0 %v1367
        %v1813 = vpop.f32.mrb[0].mxu0
        %v1814 = vadd.f32 0.0, %v1813
        %v1815 = vpop.f32.mrb[0].mxu0
        %v1816 = vadd.f32 0.0, %v1815
        %v1817 = vpop.f32.mrb[0].mxu0
        %v1818 = vpop.f32.mrb[0].mxu0
        %1819 = vdwg.mxu0
        %1820 = vmatprep.subr.bf16.mxu0 %v1006
        %1821 = vmatpush1.bf16.msra.mxu0 %v1005
        %1822 = vmatprep.subr.bf16.mxu0 %v1030
        %1823 = vmatpush1.bf16.msra.mxu0 %v1029
        %1824 = vmatprep.subr.bf16.mxu0 %v1054
        %1825 = vmatpush1.bf16.msra.mxu0 %v1053
        %1826 = vmatprep.subr.bf16.mxu0 %v1078
        %1827 = vmatpush1.bf16.msra.mxu0 %v1077
        %1828 = vmatprep.subr.bf16.mxu0 %v1102
        %1829 = vmatpush1.bf16.msra.mxu0 %v1101
        %1830 = vmatprep.subr.bf16.mxu0 %v1126
        %1831 = vmatpush1.bf16.msra.mxu0 %v1125
        %1832 = vmatprep.subr.bf16.mxu0 %v1150
        %1833 = vmatpush1.bf16.msra.mxu0 %v1149
        %1834 = vmatprep.subr.bf16.mxu0 %v1174
        %1835 = vmatpush1.bf16.msra.mxu0 %v1173
        %1836 = vmatprep.subr.bf16.mxu0 %v1198
        %1837 = vmatpush1.bf16.msra.mxu0 %v1197
        %1838 = vmatprep.subr.bf16.mxu0 %v1222
        %1839 = vmatpush1.bf16.msra.mxu0 %v1221
        %1840 = vmatprep.subr.bf16.mxu0 %v1246
        %1841 = vmatpush1.bf16.msra.mxu0 %v1245
        %1842 = vmatprep.subr.bf16.mxu0 %v1270
        %1843 = vmatpush1.bf16.msra.mxu0 %v1269
        %1844 = vmatprep.subr.bf16.mxu0 %v1294
        %1845 = vmatpush1.bf16.msra.mxu0 %v1293
        %1846 = vmatprep.subr.bf16.mxu0 %v1318
        %1847 = vmatpush1.bf16.msra.mxu0 %v1317
        %1848 = vmatprep.subr.bf16.mxu0 %v1342
        %1849 = vmatpush1.bf16.msra.mxu0 %v1341
        %1850 = vmatprep.subr.bf16.mxu0 %v1366
        %1851 = vmatpush1.bf16.msra.mxu0 %v1365
        %1852 = vmatprep.mubr.bf16.mxu0 %v1368
        %1853 = vmatmul.mubr.bf16.gmra.mrb[0].mxu0 %v1367
        %v1854 = vpop.f32.mrb[0].mxu0
        %v1855 = vadd.f32 0.0, %v1854
        %v1856 = vpop.f32.mrb[0].mxu0
        %v1857 = vadd.f32 0.0, %v1856
        %v1858 = vpop.f32.mrb[0].mxu0
        %v1859 = vpop.f32.mrb[0].mxu0
        %1860 = vdwg.mxu0
        %v1861 = vld [vmem:[%s412] sm:$0xff]
        %v1862 = vld [vmem:[%s412 + $0x8] sm:$0xff]
        %v1863 = vld [vmem:[%s412 + $0x10] sm:$0xff]
        %v1867 = vlaneseq
        %v1868 = vshrl.u32 %v1867, 7
        %v1869 = vsub.s32 0, %v1868
        %v1870 = vrot.slane %v1861, %v1869
        %v1871 = vlaneseq
        %v1872 = vshrl.u32 %v1871, 7
        %v1873 = vsub.s32 1, %v1872
        %v1874 = vrot.slane %v1861, %v1873
        %v1875 = vlaneseq
        %v1876 = vshrl.u32 %v1875, 7
        %v1877 = vsub.s32 2, %v1876
        %v1878 = vrot.slane %v1861, %v1877
        %v1879 = vlaneseq
        %v1880 = vshrl.u32 %v1879, 7
        %v1881 = vsub.s32 3, %v1880
        %v1882 = vrot.slane %v1861, %v1881
        %v1883 = vlaneseq
        %v1884 = vshrl.u32 %v1883, 7
        %v1885 = vsub.s32 4, %v1884
        %v1886 = vrot.slane %v1861, %v1885
        %v1887 = vlaneseq
        %v1888 = vshrl.u32 %v1887, 7
        %v1889 = vsub.s32 5, %v1888
        %v1890 = vrot.slane %v1861, %v1889
        %v1891 = vlaneseq
        %v1892 = vshrl.u32 %v1891, 7
        %v1893 = vsub.s32 6, %v1892
        %v1894 = vrot.slane %v1861, %v1893
        %v1895 = vlaneseq
        %v1896 = vshrl.u32 %v1895, 7
        %v1897 = vsub.s32 7, %v1896
        %v1898 = vrot.slane %v1861, %v1897
        %v1899 = vlaneseq
        %v1900 = vshrl.u32 %v1899, 7
        %v1901 = vsub.s32 0, %v1900
        %v1902 = vrot.slane %v1862, %v1901
        %v1903 = vlaneseq
        %v1904 = vshrl.u32 %v1903, 7
        %v1905 = vsub.s32 1, %v1904
        %v1906 = vrot.slane %v1862, %v1905
        %v1907 = vlaneseq
        %v1908 = vshrl.u32 %v1907, 7
        %v1909 = vsub.s32 2, %v1908
        %v1910 = vrot.slane %v1862, %v1909
        %v1911 = vlaneseq
        %v1912 = vshrl.u32 %v1911, 7
        %v1913 = vsub.s32 3, %v1912
        %v1914 = vrot.slane %v1862, %v1913
        %v1915 = vlaneseq
        %v1916 = vshrl.u32 %v1915, 7
        %v1917 = vsub.s32 4, %v1916
        %v1918 = vrot.slane %v1862, %v1917
        %v1919 = vlaneseq
        %v1920 = vshrl.u32 %v1919, 7
        %v1921 = vsub.s32 5, %v1920
        %v1922 = vrot.slane %v1862, %v1921
        %v1923 = vlaneseq
        %v1924 = vshrl.u32 %v1923, 7
        %v1925 = vsub.s32 6, %v1924
        %v1926 = vrot.slane %v1862, %v1925
        %v1927 = vlaneseq
        %v1928 = vshrl.u32 %v1927, 7
        %v1929 = vsub.s32 7, %v1928
        %v1930 = vrot.slane %v1862, %v1929
        %v1931 = vlaneseq
        %v1932 = vshrl.u32 %v1931, 7
        %v1933 = vsub.s32 0, %v1932
        %v1934 = vrot.slane %v1863, %v1933
        %v1935 = vlaneseq
        %v1936 = vshrl.u32 %v1935, 7
        %v1937 = vsub.s32 1, %v1936
        %v1938 = vrot.slane %v1863, %v1937
        %v1939 = vlaneseq
        %v1940 = vshrl.u32 %v1939, 7
        %v1941 = vsub.s32 2, %v1940
        %v1942 = vrot.slane %v1863, %v1941
        %v1943 = vlaneseq
        %v1944 = vshrl.u32 %v1943, 7
        %v1945 = vsub.s32 3, %v1944
        %v1946 = vrot.slane %v1863, %v1945
        %v1947 = vlaneseq
        %v1948 = vshrl.u32 %v1947, 7
        %v1949 = vsub.s32 4, %v1948
        %v1950 = vrot.slane %v1863, %v1949
        %v1951 = vlaneseq
        %v1952 = vshrl.u32 %v1951, 7
        %v1953 = vsub.s32 5, %v1952
        %v1954 = vrot.slane %v1863, %v1953
        %v1955 = vlaneseq
        %v1956 = vshrl.u32 %v1955, 7
        %v1957 = vsub.s32 6, %v1956
        %v1958 = vrot.slane %v1863, %v1957
        %v1959 = vlaneseq
        %v1960 = vshrl.u32 %v1959, 7
        %v1961 = vsub.s32 7, %v1960
        %v1962 = vrot.slane %v1863, %v1961
        %v1987 = vmul.f32 %v1404, %v1870
        %v1988 = vmul.f32 %v1406, %v1874
        %v1989 = vmul.f32 %v1445, %v1878
        %v1990 = vmul.f32 %v1447, %v1882
        %v1991 = vmul.f32 %v1486, %v1886
        %v1992 = vmul.f32 %v1488, %v1890
        %v1993 = vmul.f32 %v1527, %v1894
        %v1994 = vmul.f32 %v1529, %v1898
        %v1995 = vmul.f32 %v1568, %v1902
        %v1996 = vmul.f32 %v1570, %v1906
        %v1997 = vmul.f32 %v1609, %v1910
        %v1998 = vmul.f32 %v1611, %v1914
        %v1999 = vmul.f32 %v1650, %v1918
        %v2000 = vmul.f32 %v1652, %v1922
        %v2001 = vmul.f32 %v1691, %v1926
        %v2002 = vmul.f32 %v1693, %v1930
        %v2003 = vmul.f32 %v1732, %v1934
        %v2004 = vmul.f32 %v1734, %v1938
        %v2005 = vmul.f32 %v1773, %v1942
        %v2006 = vmul.f32 %v1775, %v1946
        %v2007 = vmul.f32 %v1814, %v1950
        %v2008 = vmul.f32 %v1816, %v1954
        %v2009 = vmul.f32 %v1855, %v1958
        %v2010 = vmul.f32 %v1857, %v1962
        %v2011 = vld [vmem:[%s421] sm:$0xff]
        %v2012 = vld [vmem:[%s421 + $0x8] sm:$0xff]
        %v2013 = vld [vmem:[%s421 + $0x10] sm:$0xff]
        %v2017 = vlaneseq
        %v2018 = vshrl.u32 %v2017, 7
        %v2019 = vsub.s32 0, %v2018
        %v2020 = vrot.slane %v2011, %v2019
        %v2021 = vlaneseq
        %v2022 = vshrl.u32 %v2021, 7
        %v2023 = vsub.s32 1, %v2022
        %v2024 = vrot.slane %v2011, %v2023
        %v2025 = vlaneseq
        %v2026 = vshrl.u32 %v2025, 7
        %v2027 = vsub.s32 2, %v2026
        %v2028 = vrot.slane %v2011, %v2027
        %v2029 = vlaneseq
        %v2030 = vshrl.u32 %v2029, 7
        %v2031 = vsub.s32 3, %v2030
        %v2032 = vrot.slane %v2011, %v2031
        %v2033 = vlaneseq
        %v2034 = vshrl.u32 %v2033, 7
        %v2035 = vsub.s32 4, %v2034
        %v2036 = vrot.slane %v2011, %v2035
        %v2037 = vlaneseq
        %v2038 = vshrl.u32 %v2037, 7
        %v2039 = vsub.s32 5, %v2038
        %v2040 = vrot.slane %v2011, %v2039
        %v2041 = vlaneseq
        %v2042 = vshrl.u32 %v2041, 7
        %v2043 = vsub.s32 6, %v2042
        %v2044 = vrot.slane %v2011, %v2043
        %v2045 = vlaneseq
        %v2046 = vshrl.u32 %v2045, 7
        %v2047 = vsub.s32 7, %v2046
        %v2048 = vrot.slane %v2011, %v2047
        %v2049 = vlaneseq
        %v2050 = vshrl.u32 %v2049, 7
        %v2051 = vsub.s32 0, %v2050
        %v2052 = vrot.slane %v2012, %v2051
        %v2053 = vlaneseq
        %v2054 = vshrl.u32 %v2053, 7
        %v2055 = vsub.s32 1, %v2054
        %v2056 = vrot.slane %v2012, %v2055
        %v2057 = vlaneseq
        %v2058 = vshrl.u32 %v2057, 7
        %v2059 = vsub.s32 2, %v2058
        %v2060 = vrot.slane %v2012, %v2059
        %v2061 = vlaneseq
        %v2062 = vshrl.u32 %v2061, 7
        %v2063 = vsub.s32 3, %v2062
        %v2064 = vrot.slane %v2012, %v2063
        %v2065 = vlaneseq
        %v2066 = vshrl.u32 %v2065, 7
        %v2067 = vsub.s32 4, %v2066
        %v2068 = vrot.slane %v2012, %v2067
        %v2069 = vlaneseq
        %v2070 = vshrl.u32 %v2069, 7
        %v2071 = vsub.s32 5, %v2070
        %v2072 = vrot.slane %v2012, %v2071
        %v2073 = vlaneseq
        %v2074 = vshrl.u32 %v2073, 7
        %v2075 = vsub.s32 6, %v2074
        %v2076 = vrot.slane %v2012, %v2075
        %v2077 = vlaneseq
        %v2078 = vshrl.u32 %v2077, 7
        %v2079 = vsub.s32 7, %v2078
        %v2080 = vrot.slane %v2012, %v2079
        %v2081 = vlaneseq
        %v2082 = vshrl.u32 %v2081, 7
        %v2083 = vsub.s32 0, %v2082
        %v2084 = vrot.slane %v2013, %v2083
        %v2085 = vlaneseq
        %v2086 = vshrl.u32 %v2085, 7
        %v2087 = vsub.s32 1, %v2086
        %v2088 = vrot.slane %v2013, %v2087
        %v2089 = vlaneseq
        %v2090 = vshrl.u32 %v2089, 7
        %v2091 = vsub.s32 2, %v2090
        %v2092 = vrot.slane %v2013, %v2091
        %v2093 = vlaneseq
        %v2094 = vshrl.u32 %v2093, 7
        %v2095 = vsub.s32 3, %v2094
        %v2096 = vrot.slane %v2013, %v2095
        %v2097 = vlaneseq
        %v2098 = vshrl.u32 %v2097, 7
        %v2099 = vsub.s32 4, %v2098
        %v2100 = vrot.slane %v2013, %v2099
        %v2101 = vlaneseq
        %v2102 = vshrl.u32 %v2101, 7
        %v2103 = vsub.s32 5, %v2102
        %v2104 = vrot.slane %v2013, %v2103
        %v2105 = vlaneseq
        %v2106 = vshrl.u32 %v2105, 7
        %v2107 = vsub.s32 6, %v2106
        %v2108 = vrot.slane %v2013, %v2107
        %v2109 = vlaneseq
        %v2110 = vshrl.u32 %v2109, 7
        %v2111 = vsub.s32 7, %v2110
        %v2112 = vrot.slane %v2013, %v2111
        %v2137 = vadd.f32 %v1987, %v2020
        %v2138 = vadd.f32 %v1988, %v2024
        %v2139 = vadd.f32 %v1989, %v2028
        %v2140 = vadd.f32 %v1990, %v2032
        %v2141 = vadd.f32 %v1991, %v2036
        %v2142 = vadd.f32 %v1992, %v2040
        %v2143 = vadd.f32 %v1993, %v2044
        %v2144 = vadd.f32 %v1994, %v2048
        %v2145 = vadd.f32 %v1995, %v2052
        %v2146 = vadd.f32 %v1996, %v2056
        %v2147 = vadd.f32 %v1997, %v2060
        %v2148 = vadd.f32 %v1998, %v2064
        %v2149 = vadd.f32 %v1999, %v2068
        %v2150 = vadd.f32 %v2000, %v2072
        %v2151 = vadd.f32 %v2001, %v2076
        %v2152 = vadd.f32 %v2002, %v2080
        %v2153 = vadd.f32 %v2003, %v2084
        %v2154 = vadd.f32 %v2004, %v2088
        %v2155 = vadd.f32 %v2005, %v2092
        %v2156 = vadd.f32 %v2006, %v2096
        %v2157 = vadd.f32 %v2007, %v2100
        %v2158 = vadd.f32 %v2008, %v2104
        %v2159 = vadd.f32 %v2009, %v2108
        %v2160 = vadd.f32 %v2010, %v2112
        %v2161 = vpack.c.bf16 %v2137, %v2137
        %v2162 = vpack.c.bf16 %v2138, %v2138
        %v2163 = vpack.c.bf16 %v2139, %v2139
        %v2164 = vpack.c.bf16 %v2140, %v2140
        %v2165 = vpack.c.bf16 %v2141, %v2141
        %v2166 = vpack.c.bf16 %v2142, %v2142
        %v2167 = vpack.c.bf16 %v2143, %v2143
        %v2168 = vpack.c.bf16 %v2144, %v2144
        %v2169 = vpack.c.bf16 %v2145, %v2145
        %v2170 = vpack.c.bf16 %v2146, %v2146
        %v2171 = vpack.c.bf16 %v2147, %v2147
        %v2172 = vpack.c.bf16 %v2148, %v2148
        %v2173 = vpack.c.bf16 %v2149, %v2149
        %v2174 = vpack.c.bf16 %v2150, %v2150
        %v2175 = vpack.c.bf16 %v2151, %v2151
        %v2176 = vpack.c.bf16 %v2152, %v2152
        %v2177 = vpack.c.bf16 %v2153, %v2153
        %v2178 = vpack.c.bf16 %v2154, %v2154
        %v2179 = vpack.c.bf16 %v2155, %v2155
        %v2180 = vpack.c.bf16 %v2156, %v2156
        %v2181 = vpack.c.bf16 %v2157, %v2157
        %v2182 = vpack.c.bf16 %v2158, %v2158
        %v2183 = vpack.c.bf16 %v2159, %v2159
        %v2184 = vpack.c.bf16 %v2160, %v2160
        %v2209 = vunpack.c.l.b16 %v2161
        %v2210 = vunpack.c.l.b16 %v2162
        %v2211 = vunpack.c.l.b16 %v2163
        %v2212 = vunpack.c.l.b16 %v2164
        %v2213 = vunpack.c.l.b16 %v2165
        %v2214 = vunpack.c.l.b16 %v2166
        %v2215 = vunpack.c.l.b16 %v2167
        %v2216 = vunpack.c.l.b16 %v2168
        %v2217 = vunpack.c.l.b16 %v2169
        %v2218 = vunpack.c.l.b16 %v2170
        %v2219 = vunpack.c.l.b16 %v2171
        %v2220 = vunpack.c.l.b16 %v2172
        %v2221 = vunpack.c.l.b16 %v2173
        %v2222 = vunpack.c.l.b16 %v2174
        %v2223 = vunpack.c.l.b16 %v2175
        %v2224 = vunpack.c.l.b16 %v2176
        %v2225 = vunpack.c.l.b16 %v2177
        %v2226 = vunpack.c.l.b16 %v2178
        %v2227 = vunpack.c.l.b16 %v2179
        %v2228 = vunpack.c.l.b16 %v2180
        %v2229 = vunpack.c.l.b16 %v2181
        %v2230 = vunpack.c.l.b16 %v2182
        %v2231 = vunpack.c.l.b16 %v2183
        %v2232 = vunpack.c.l.b16 %v2184
        %v2233 = vpack.c.b16 %v2210, %v2209
        %v2234 = vpack.c.b16 %v2212, %v2211
        %v2235 = vpack.c.b16 %v2214, %v2213
        %v2236 = vpack.c.b16 %v2216, %v2215
        %v2237 = vpack.c.b16 %v2218, %v2217
        %v2238 = vpack.c.b16 %v2220, %v2219
        %v2239 = vpack.c.b16 %v2222, %v2221
        %v2240 = vpack.c.b16 %v2224, %v2223
        %v2241 = vpack.c.b16 %v2226, %v2225
        %v2242 = vpack.c.b16 %v2228, %v2227
        %v2243 = vpack.c.b16 %v2230, %v2229
        %v2244 = vpack.c.b16 %v2232, %v2231
        %2257 = vst [vmem:[%s463] sm:$0xff] %v2233
        %2258 = vst [vmem:[%s463 + $0x8] sm:$0xff] %v2234
        %2259 = vst [vmem:[%s463 + $0x10] sm:$0xff] %v2235
        %2260 = vst [vmem:[%s463 + $0x18] sm:$0xff] %v2236
        %2261 = vst [vmem:[%s463 + $0x20] sm:$0xff] %v2237
        %2262 = vst [vmem:[%s463 + $0x28] sm:$0xff] %v2238
        %2263 = vst [vmem:[%s463 + $0x30] sm:$0xff] %v2239
        %2264 = vst [vmem:[%s463 + $0x38] sm:$0xff] %v2240
        %2265 = vst [vmem:[%s463 + $0x40] sm:$0xff] %v2241
        %2266 = vst [vmem:[%s463 + $0x48] sm:$0xff] %v2242
        %2267 = vst [vmem:[%s463 + $0x50] sm:$0xff] %v2243
        %2268 = vst [vmem:[%s463 + $0x58] sm:$0xff] %v2244
        %s2269 = sand.u32 %s222, 1
        %s2270 = scalar_lea.sflag [#allocation4], %s2269
        %s2271 = sand.u32 %s222, 1
        %s2272 = smul.addr %s2271, 96
        %s2273 = scalar_lea.vmem [#allocation16], %s2272
        // Predicated region
        $region85: #{tpu_custom_call.1} parent=51 // pred_check
          %p2274 = pneg %p232
        $region86: #{tpu_custom_call.1} parent=51 // pred_check_branch
          %2276 = sbr.rel (%p2274) target = $region88
        $region87: #{tpu_custom_call.1} parent=51 // pred_region
          %s2277 = smul.u32 24, %s31
          %s2279 = ssub.s32 1536, 1536
          %2280 = vsyncadd %s2270, %s2279
          %s2281 = smul.addr %s2277, 64
          %s2282 = scalar_lea.hbm %s8, %s2281
          %s2284 = sshll.u32 %s2273, 4
          %s2285 = int_to_ptr.vmem [resolvable:$true] %s2284
          %2287 = dma.vmem_to_hbm [thread:$0]  %s2285, 1536, %s2282, %s2270
        $region88: #{tpu_custom_call.1} parent=51 // pred_fallthru
          _
      $region52: #{tpu_custom_call.1} parent=5 // pred_fallthru
        _
      %p2288 = scmp.le.s32.totalorder 2, %s26
      // Predicated region
      $region89: #{tpu_custom_call.1} parent=5 // pred_check
        %p2289 = pneg %p2288
      $region90: #{tpu_custom_call.1} parent=5 // pred_check_branch
        %2291 = sbr.rel (%p2289) target = $region92
      $region91: #{tpu_custom_call.1} parent=5 // pred_region
        %s2292 = ssub.s32 %s26, 2
        // Predicated region
        $region93: #{tpu_custom_call.1} parent=91 // pred_check
          %p2293 = pneg %p238
        $region94: #{tpu_custom_call.1} parent=91 // pred_check_branch
          %2295 = sbr.rel (%p2293) target = $region96
        $region95: #{tpu_custom_call.1} parent=91 // pred_region
          %s2296 = sand.u32 %s223, 1
          %s2297 = scalar_lea.sflag [#allocation4], %s2296
          %s2298 = sand.u32 %s223, 1
          %s2299 = smul.addr %s2298, 96
          %s2300 = scalar_lea.vmem [#allocation16], %s2299
          %2301 = dma.done %s2297, 1536
        $region96: #{tpu_custom_call.1} parent=91 // pred_fallthru
          _
      $region92: #{tpu_custom_call.1} parent=5 // pred_fallthru
        _
    $region6: #{tpu_custom_call.1} parent=1 // loop_footer
      %s30 = sadd.s32 1, %s26
    $region7: #{tpu_custom_call.1} parent=1 // loop_footer_branch
      %25 = sbr.rel target = $region3
    $region8: #{tpu_custom_call.1} parent=1 // loop_exit
      _
    %2302 = vsyncpa [#allocation3], 1
    %s2303 = scalar_lea.sflag [#allocation3], 1
    %2304 = vsyncpa %s2303, 1
    %2305 = vsyncpa [#allocation6], 1
    %2306 = vsyncpa [#allocation9], 1
    %2307 = vsyncpa [#allocation12], 1
    %s2308 = scalar_lea.sflag [#allocation12], 1
    %2309 = vsyncpa %s2308, 1
    %2310 = vsyncpa [#allocation15], 1
    %s2311 = scalar_lea.sflag [#allocation15], 1
    %2312 = vsyncpa %s2311, 1
    %2313 = vsyncpa [#allocation4], 1
    %s2314 = scalar_lea.sflag [#allocation4], 1
    %2315 = vsyncpa %s2314, 1

</llo_original>
